<compile_context>
chip_gen: v6e
topology: v6e:2x2x1
jax: 0.10.0
libtpu: 0.0.40
codegen_flags: <defaults>
</compile_context>

<pallas_src>
import functools

import jax
import jax.numpy as jnp
from jax.experimental import pallas as pl
from jax.experimental.pallas import tpu as pltpu


def _tucker_loss_kernel(h_ref, r_ref, t_ref, core_ref, partial_ref):
    """One batch tile: fused pos/neg TuckER scores -> partial hinge sum (lane-dense)."""
    _, TB, D = h_ref.shape          # h_ref/t_ref: (2, TB, D) f32 ; r_ref: (2, TB, D) bf16
    M = 2 * TB                      # pos rows [0, TB), neg rows [TB, 2*TB)

    # One MXU matmul for pos+neg:  (2*TB, D) @ (D, D*D) -> (2*TB, D*D), f32 accumulation.
    r2 = r_ref[...].reshape(M, D)
    rc = jnp.dot(r2, core_ref[...], preferred_element_type=jnp.float32)   # (M, D*D)

    # Lane-dense head/tail expansion over the D*D axis (no (B, D, D) reshape of rc).
    h2 = h_ref[...].reshape(M, D)
    t2 = t_ref[...].reshape(M, D)
    h_rep = jnp.repeat(h2, D, axis=1)          # h_rep[b, j*D + k] = h[b, j]
    t_til = jnp.tile(t2, (1, D))               # t_til[b, j*D + k] = t[b, k]

    # score[b] = sum_{j,k} (sum_i W[i,j,k] r[b,i]) * h[b,j] * t[b,k]   (full-lane reduce)
    scores = jnp.sum(rc * (h_rep * t_til), axis=1, keepdims=True)        # (M, 1) f32

    pos = scores[:TB]
    neg = scores[TB:]
    hinge = jnp.maximum(1.0 - pos + neg, 0.0)                            # (TB, 1)
    tile_sum = jnp.sum(hinge, keepdims=True)                             # (1, 1)

    # Unmasked full-vreg store of the partial sum (reduced in the wrapper).
    partial_ref[...] = jnp.broadcast_to(tile_sum, partial_ref.shape).astype(partial_ref.dtype)


def _pick_tile(B, max_tile=256):
    """Largest batch tile <= max_tile that divides B and is sublane-aligned (or B itself)."""
    if B <= max_tile:
        return B
    for tb in range(max_tile - (max_tile % 8), 7, -8):
        if B % tb == 0:
            return tb
    return B


def tucker_forward(pos_triplets, neg_triplets, entity_emb, relation_emb, core,
                   *, max_tile=256):
    """JAX wrapper: embedding gather (glue) + Pallas kernel for the hot path."""
    B = pos_triplets.shape[0]
    D = entity_emb.shape[1]
    DD = D * D

    # Stack pos over neg on a leading axis so each batch tile pairs its pos/neg rows.
    trip = jnp.stack([pos_triplets, neg_triplets], axis=0)                # (2, B, 3)
    h = jnp.take(entity_emb, trip[..., 0], axis=0)                        # (2, B, D) f32
    r = jnp.take(relation_emb, trip[..., 1], axis=0).astype(jnp.bfloat16)  # (2, B, D) bf16
    t = jnp.take(entity_emb, trip[..., 2], axis=0)                        # (2, B, D) f32

    # core[i, j, k] -> core_flat[i, j*D + k]; bf16 halves its DMA and doubles MXU rate.
    core_flat = core.reshape(D, DD).astype(jnp.bfloat16)

    TB = _pick_tile(B, max_tile)
    num_tiles = B // TB

    emb_spec = pl.BlockSpec((2, TB, D), lambda i: (0, i, 0))
    core_spec = pl.BlockSpec((D, DD), lambda i: (0, 0))        # constant -> stays resident
    out_spec = pl.BlockSpec((1, 8, 128), lambda i: (i, 0, 0))  # lane-dense partial sums

    partials = pl.pallas_call(
        _tucker_loss_kernel,
        out_shape=jax.ShapeDtypeStruct((num_tiles, 8, 128), jnp.float32),
        grid=(num_tiles,),
        in_specs=[emb_spec, emb_spec, emb_spec, core_spec],
        out_specs=out_spec,
        compiler_params=pltpu.CompilerParams(
            dimension_semantics=("parallel",)),  # independent tiles -> both TCs on v7x
    )(h, r, t, core_flat)

    return jnp.sum(partials[:, 0, 0]) / B


def _reference_forward(pos_triplets, neg_triplets, entity_emb, relation_emb, core):
    """Pure-JAX f32 reference mirroring the PyTorch module (dropout = identity)."""
    def score(trip):
        h = entity_emb[trip[:, 0]]
        r = relation_emb[trip[:, 1]]
        t = entity_emb[trip[:, 2]]
        rc = jnp.einsum('ijk,bi->bjk', core, r)
        out = jnp.einsum('bjk,bj->bk', rc, h)
        return jnp.sum(out * t, axis=1)

    pos = score(pos_triplets)
    neg = score(neg_triplets)
    return jnp.mean(jax.nn.relu(1.0 - pos + neg))


if __name__ == "__main__":
    # Small, forward-consistent shapes.
    num_entities = 50
    num_relations = 10
    embedding_dim = 32
    batch = 8

    key = jax.random.PRNGKey(0)
    k_ent, k_rel, k_core, k_pos, k_neg = jax.random.split(key, 5)

    # Deterministic Xavier-uniform-style init (matches torch.nn.init.xavier_uniform_ bounds).
    ent_bound = (6.0 / (num_entities + embedding_dim)) ** 0.5
    rel_bound = (6.0 / (num_relations + embedding_dim)) ** 0.5
    core_bound = (6.0 / (2.0 * embedding_dim * embedding_dim)) ** 0.5

    entity_emb = jax.random.uniform(
        k_ent, (num_entities, embedding_dim), jnp.float32, -ent_bound, ent_bound)
    relation_emb = jax.random.uniform(
        k_rel, (num_relations, embedding_dim), jnp.float32, -rel_bound, rel_bound)
    core = jax.random.uniform(
        k_core, (embedding_dim, embedding_dim, embedding_dim), jnp.float32,
        -core_bound, core_bound)

    pos_triplets = jnp.stack([
        jax.random.randint(jax.random.fold_in(k_pos, 0), (batch,), 0, num_entities),
        jax.random.randint(jax.random.fold_in(k_pos, 1), (batch,), 0, num_relations),
        jax.random.randint(jax.random.fold_in(k_pos, 2), (batch,), 0, num_entities),
    ], axis=1).astype(jnp.int32)
    neg_triplets = jnp.stack([
        jax.random.randint(jax.random.fold_in(k_neg, 0), (batch,), 0, num_entities),
        jax.random.randint(jax.random.fold_in(k_neg, 1), (batch,), 0, num_relations),
        jax.random.randint(jax.random.fold_in(k_neg, 2), (batch,), 0, num_entities),
    ], axis=1).astype(jnp.int32)

    loss = tucker_forward(pos_triplets, neg_triplets, entity_emb, relation_emb, core)
    loss = jax.block_until_ready(loss)

    ref = _reference_forward(pos_triplets, neg_triplets, entity_emb, relation_emb, core)
    # Matmul operands (relation emb + core) are bf16 on the MXU -> loosened tolerance vs f32.
    assert jnp.allclose(loss, ref, atol=2e-2, rtol=2e-2), (loss, ref)

    print("KERNEL_OK")
</pallas_src>

<mosaic_0001>
module attributes {stable_mosaic.version = 11 : i64} {
  func.func @_tucker_loss_kernel(%arg0: i32, %arg1: memref<2x8x32xf32, #tpu.memory_space<vmem>>, %arg2: memref<2x8x32xbf16, #tpu.memory_space<vmem>>, %arg3: memref<2x8x32xf32, #tpu.memory_space<vmem>>, %arg4: memref<32x1024xbf16, #tpu.memory_space<vmem>>, %arg5: memref<1x8x128xf32, #tpu.memory_space<vmem>>) attributes {dimension_semantics = [#tpu.dimension_semantics<parallel>], iteration_bounds = array<i64: 1>, scalar_prefetch = 0 : i64, scratch_operands = 0 : i64, tpu.core_type = #tpu.core_type<tc>, window_params = [{transform_indices = @transform_0, window_bounds = array<i64: 2, 8, 32>}, {transform_indices = @transform_1, window_bounds = array<i64: 2, 8, 32>}, {transform_indices = @transform_2, window_bounds = array<i64: 2, 8, 32>}, {pipeline_mode = #tpu.pipeline_mode<synchronous>, transform_indices = @transform_3, window_bounds = array<i64: 32, 1024>}, {transform_indices = @transform_4, window_bounds = array<i64: 1, 8, 128>}]} {
    %c0 = arith.constant 0 : index
    %c0_0 = arith.constant 0 : index
    %c0_1 = arith.constant 0 : index
    %0 = vector.load %arg2[%c0, %c0_0, %c0_1] : memref<2x8x32xbf16, #tpu.memory_space<vmem>>, vector<2x8x32xbf16>
    %1 = vector.shape_cast %0 : vector<2x8x32xbf16> to vector<16x32xbf16>
    %c0_2 = arith.constant 0 : index
    %c0_3 = arith.constant 0 : index
    %2 = vector.load %arg4[%c0_2, %c0_3] : memref<32x1024xbf16, #tpu.memory_space<vmem>>, vector<32x1024xbf16>
    %cst = arith.constant dense<0.000000e+00> : vector<16x1024xf32>
    %3 = tpu.matmul %1, %2, %cst {dimension_numbers = #tpu.dot_dimension_numbers<[1], [0], [0], [1], [0, 0, 1, 1], [], []>} : vector<16x32xbf16>, vector<32x1024xbf16>, vector<16x1024xf32> -> vector<16x1024xf32>
    %c0_4 = arith.constant 0 : index
    %c0_5 = arith.constant 0 : index
    %c0_6 = arith.constant 0 : index
    %4 = vector.load %arg1[%c0_4, %c0_5, %c0_6] : memref<2x8x32xf32, #tpu.memory_space<vmem>>, vector<2x8x32xf32>
    %5 = vector.shape_cast %4 : vector<2x8x32xf32> to vector<16x32xf32>
    %c0_7 = arith.constant 0 : index
    %c0_8 = arith.constant 0 : index
    %c0_9 = arith.constant 0 : index
    %6 = vector.load %arg3[%c0_7, %c0_8, %c0_9] : memref<2x8x32xf32, #tpu.memory_space<vmem>>, vector<2x8x32xf32>
    %7 = vector.shape_cast %6 : vector<2x8x32xf32> to vector<16x32xf32>
    %8 = vector.shape_cast %5 : vector<16x32xf32> to vector<16x32x1xf32>
    %9 = vector.broadcast %8 : vector<16x32x1xf32> to vector<16x32x32xf32>
    %10 = vector.shape_cast %9 : vector<16x32x32xf32> to vector<16x1024xf32>
    %11 = tpu.concatenate %7, %7, %7, %7, %7, %7, %7, %7, %7, %7, %7, %7, %7, %7, %7, %7, %7, %7, %7, %7, %7, %7, %7, %7, %7, %7, %7, %7, %7, %7, %7, %7 in 1 : vector<16x32xf32>, vector<16x32xf32>, vector<16x32xf32>, vector<16x32xf32>, vector<16x32xf32>, vector<16x32xf32>, vector<16x32xf32>, vector<16x32xf32>, vector<16x32xf32>, vector<16x32xf32>, vector<16x32xf32>, vector<16x32xf32>, vector<16x32xf32>, vector<16x32xf32>, vector<16x32xf32>, vector<16x32xf32>, vector<16x32xf32>, vector<16x32xf32>, vector<16x32xf32>, vector<16x32xf32>, vector<16x32xf32>, vector<16x32xf32>, vector<16x32xf32>, vector<16x32xf32>, vector<16x32xf32>, vector<16x32xf32>, vector<16x32xf32>, vector<16x32xf32>, vector<16x32xf32>, vector<16x32xf32>, vector<16x32xf32>, vector<16x32xf32> -> vector<16x1024xf32>
    %12 = arith.mulf %10, %11 : vector<16x1024xf32>
    %13 = arith.mulf %3, %12 : vector<16x1024xf32>
    %cst_10 = arith.constant dense<0.000000e+00> : vector<16xf32>
    %14 = vector.multi_reduction <add>, %13, %cst_10 [1] : vector<16x1024xf32> to vector<16xf32>
    %15 = vector.shape_cast %14 : vector<16xf32> to vector<16x1xf32>
    %16 = vector.extract_strided_slice %15 {offsets = [0, 0], sizes = [8, 1], strides = [1, 1]} : vector<16x1xf32> to vector<8x1xf32>
    %17 = vector.extract_strided_slice %15 {offsets = [8, 0], sizes = [8, 1], strides = [1, 1]} : vector<16x1xf32> to vector<8x1xf32>
    %cst_11 = arith.constant 1.000000e+00 : f32
    %18 = vector.broadcast %cst_11 : f32 to vector<8x1xf32>
    %19 = arith.subf %18, %16 : vector<8x1xf32>
    %20 = arith.addf %19, %17 : vector<8x1xf32>
    %cst_12 = arith.constant 0.000000e+00 : f32
    %21 = vector.broadcast %cst_12 : f32 to vector<8x1xf32>
    %22 = arith.maximumf %20, %21 : vector<8x1xf32>
    %23 = vector.shape_cast %22 : vector<8x1xf32> to vector<1x8x1xf32>
    %cst_13 = arith.constant dense<0.000000e+00> : vector<1xf32>
    %24 = vector.multi_reduction <add>, %23, %cst_13 [1, 2] : vector<1x8x1xf32> to vector<1xf32>
    %25 = vector.shape_cast %24 : vector<1xf32> to vector<1x1x1xf32>
    %26 = vector.extract %25[0, 0, 0] : f32 from vector<1x1x1xf32>
    %27 = vector.broadcast %26 : f32 to vector<1x1xf32>
    %28 = vector.shape_cast %27 : vector<1x1xf32> to vector<1x1x1xf32>
    %29 = vector.broadcast %28 : vector<1x1x1xf32> to vector<1x8x128xf32>
    %c0_14 = arith.constant 0 : index
    %c0_15 = arith.constant 0 : index
    %c0_16 = arith.constant 0 : index
    %30 = vector.load %arg5[%c0_14, %c0_15, %c0_16] : memref<1x8x128xf32, #tpu.memory_space<vmem>>, vector<1x8x128xf32>
    tpu.vector_store %arg5[%c0_14, %c0_15, %c0_16], %29 {strides = array<i32>} : memref<1x8x128xf32, #tpu.memory_space<vmem>>, vector<1x8x128xf32>,
    return
  }
  func.func @transform_0(%arg0: i32) -> (i32, i32, i32) {
    %c0_i32 = arith.constant 0 : i32
    %c0_i32_0 = arith.constant 0 : i32
    %c0_i32_1 = arith.constant 0 : i32
    return %c0_i32, %arg0, %c0_i32_0 : i32, i32, i32
  }
  func.func @transform_1(%arg0: i32) -> (i32, i32, i32) {
    %c0_i32 = arith.constant 0 : i32
    %c0_i32_0 = arith.constant 0 : i32
    %c0_i32_1 = arith.constant 0 : i32
    return %c0_i32, %arg0, %c0_i32_0 : i32, i32, i32
  }
  func.func @transform_2(%arg0: i32) -> (i32, i32, i32) {
    %c0_i32 = arith.constant 0 : i32
    %c0_i32_0 = arith.constant 0 : i32
    %c0_i32_1 = arith.constant 0 : i32
    return %c0_i32, %arg0, %c0_i32_0 : i32, i32, i32
  }
  func.func @transform_3(%arg0: i32) -> (i32, i32) {
    %c0_i32 = arith.constant 0 : i32
    %c0_i32_0 = arith.constant 0 : i32
    %c0_i32_1 = arith.constant 0 : i32
    return %c0_i32, %c0_i32_0 : i32, i32
  }
  func.func @transform_4(%arg0: i32) -> (i32, i32, i32) {
    %c0_i32 = arith.constant 0 : i32
    %c0_i32_0 = arith.constant 0 : i32
    %c0_i32_1 = arith.constant 0 : i32
    return %arg0, %c0_i32, %c0_i32_0 : i32, i32, i32
  }
}

</mosaic_0001>

<llo_original>
// kernel: tpu_custom_call.1
$region0: #{tpu_custom_call.1}
  #allocation0 [shape = 'u32[]', space=smem, size = 0x4, offset = 0x4, fixed_abs, tag = 'smem constant byte address 0x4 - core index']
  #allocation1 [shape = 'u32[144,128]{1,0:T(1,128)}', space=vmem, size = 0x12000, scoped, tag = 'internal scratch']
  %s0 = inlined_call_operand.hbm [shape: f32[2,8,32], index: 0, kind: input, shape index: {}]
  %s1 = inlined_call_operand.hbm [shape: bf16[2,8,32], index: 1, kind: input, shape index: {}]
  %s2 = inlined_call_operand.hbm [shape: f32[2,8,32], index: 2, kind: input, shape index: {}]
  %s3 = inlined_call_operand.hbm [shape: bf16[32,1024], index: 3, kind: input, shape index: {}]
  %s4 = inlined_call_operand.hbm [shape: f32[1,8,128], index: 4, kind: output, shape index: {}]
  %s5 = sld [smem:[#allocation0]]
  $region42: #{tpu_custom_call.1} parent=0
    _
  %s7 = ssub.s32 1, %s5
  %s8 = scalar_select 0, %s7, %s5
  $region1: #{tpu_custom_call.1} parent=0
    #allocation2 [shape = 'u8[8192]{0}', space=vmem, size = 0x2000, scoped, tag = 'input window, operand 0, single buffered']
    #allocation3 [shape = 's32[1]{0}', space=sflag, size = 0x4, scoped, tag = 'scoped memory for tpu_custom_call.1']
    #allocation4 [shape = 's32[1]{0}', space=sflag, size = 0x4, scoped, tag = 'scoped memory for tpu_custom_call.1']
    #allocation5 [shape = 'u8[4096]{0}', space=vmem, size = 0x1000, scoped, tag = 'input window, operand 1, single buffered']
    #allocation6 [shape = 's32[1]{0}', space=sflag, size = 0x4, scoped, tag = 'scoped memory for tpu_custom_call.1']
    #allocation7 [shape = 'u8[8192]{0}', space=vmem, size = 0x2000, scoped, tag = 'input window, operand 2, single buffered']
    #allocation8 [shape = 'u8[65536]{0}', space=vmem, size = 0x10000, scoped, tag = 'input window, operand 3, single buffered']
    #allocation9 [shape = 's32[1]{0}', space=sflag, size = 0x4, scoped, tag = 'scoped memory for tpu_custom_call.1']
    #allocation10 [shape = 'u8[4096]{0}', space=vmem, size = 0x1000, scoped, tag = 'output window, operand 0, single buffered']
    %9 = vsyncpa [#allocation3], 0
    %10 = vsyncpa [#allocation6], 0
    %11 = vsyncpa [#allocation9], 0
    %12 = vsyncpa [#allocation4], 0
    // Predicated region
    $region2: #{tpu_custom_call.1} parent=1 // pred_check
      _
    $region3: #{tpu_custom_call.1} parent=1 // pred_check_branch
      %14 = sbr.rel (0) target = $region5
    $region4: #{tpu_custom_call.1} parent=1 // pred_region
      %s16 = ssub.s32 256, 256
      %17 = vsyncadd [#allocation3], %s16
      %s18 = sshll.u32 [#allocation2], 4
      %s19 = int_to_ptr.vmem [resolvable:$true] %s18
      %24 = dma.hbm_to_vmem [thread:$0]  %s0, 256, %s19, [#allocation3], 128, 128, 8
    $region5: #{tpu_custom_call.1} parent=1 // pred_fallthru
      _
    // Predicated region
    $region6: #{tpu_custom_call.1} parent=1 // pred_check
      _
    $region7: #{tpu_custom_call.1} parent=1 // pred_check_branch
      %26 = sbr.rel (0) target = $region9
    $region8: #{tpu_custom_call.1} parent=1 // pred_region
      %s28 = ssub.s32 128, 128
      %29 = vsyncadd [#allocation6], %s28
      %s30 = sshll.u32 [#allocation5], 4
      %s31 = int_to_ptr.vmem [resolvable:$true] %s30
      %36 = dma.hbm_to_vmem [thread:$0]  %s1, 128, %s31, [#allocation6], 64, 64, 4
    $region9: #{tpu_custom_call.1} parent=1 // pred_fallthru
      _
    // Predicated region
    $region10: #{tpu_custom_call.1} parent=1 // pred_check
      _
    $region11: #{tpu_custom_call.1} parent=1 // pred_check_branch
      %38 = sbr.rel (0) target = $region13
    $region12: #{tpu_custom_call.1} parent=1 // pred_region
      %s40 = ssub.s32 256, 256
      %41 = vsyncadd [#allocation6], %s40
      %s42 = sshll.u32 [#allocation7], 4
      %s43 = int_to_ptr.vmem [resolvable:$true] %s42
      %48 = dma.hbm_to_vmem [thread:$0]  %s2, 256, %s43, [#allocation6], 128, 128, 8
    $region13: #{tpu_custom_call.1} parent=1 // pred_fallthru
      _
    // Predicated region
    $region14: #{tpu_custom_call.1} parent=1 // pred_check
      _
    $region15: #{tpu_custom_call.1} parent=1 // pred_check_branch
      %50 = sbr.rel (0) target = $region17
    $region16: #{tpu_custom_call.1} parent=1 // pred_region
      %s52 = ssub.s32 2048, 2048
      %53 = vsyncadd [#allocation9], %s52
      %s54 = sshll.u32 [#allocation8], 4
      %s55 = int_to_ptr.vmem [resolvable:$true] %s54
      %60 = dma.hbm_to_vmem [thread:$0]  %s3, 2048, %s55, [#allocation9], 512, 512, 32
    $region17: #{tpu_custom_call.1} parent=1 // pred_fallthru
      _
    // Predicated region
    $region18: #{tpu_custom_call.1} parent=1 // pred_check
      _
    $region19: #{tpu_custom_call.1} parent=1 // pred_check_branch
      %62 = sbr.rel (0) target = $region21
    $region20: #{tpu_custom_call.1} parent=1 // pred_region
      %63 = dma.done [#allocation3], 256
    $region21: #{tpu_custom_call.1} parent=1 // pred_fallthru
      _
    // Predicated region
    $region22: #{tpu_custom_call.1} parent=1 // pred_check
      _
    $region23: #{tpu_custom_call.1} parent=1 // pred_check_branch
      %65 = sbr.rel (0) target = $region25
    $region24: #{tpu_custom_call.1} parent=1 // pred_region
      %66 = dma.done [#allocation6], 128
    $region25: #{tpu_custom_call.1} parent=1 // pred_fallthru
      _
    // Predicated region
    $region26: #{tpu_custom_call.1} parent=1 // pred_check
      _
    $region27: #{tpu_custom_call.1} parent=1 // pred_check_branch
      %68 = sbr.rel (0) target = $region29
    $region28: #{tpu_custom_call.1} parent=1 // pred_region
      %69 = dma.done [#allocation6], 256
    $region29: #{tpu_custom_call.1} parent=1 // pred_fallthru
      _
    // Predicated region
    $region30: #{tpu_custom_call.1} parent=1 // pred_check
      _
    $region31: #{tpu_custom_call.1} parent=1 // pred_check_branch
      %71 = sbr.rel (0) target = $region33
    $region32: #{tpu_custom_call.1} parent=1 // pred_region
      %72 = dma.done [#allocation9], 2048
    $region33: #{tpu_custom_call.1} parent=1 // pred_fallthru
      _
    %v74 = vld [vmem:[#allocation5] sm:$0xf]
    %v75 = vld [vmem:[#allocation5 + $0x4] sm:$0xf]
    %v76 = vld [vmem:[#allocation8] sm:$0xff]
    %v77 = vld [vmem:[#allocation8 + $0x8] sm:$0xff]
    %v78 = vld [vmem:[#allocation8 + $0x10] sm:$0xff]
    %v79 = vld [vmem:[#allocation8 + $0x18] sm:$0xff]
    %v80 = vld [vmem:[#allocation8 + $0x20] sm:$0xff]
    %v81 = vld [vmem:[#allocation8 + $0x28] sm:$0xff]
    %v82 = vld [vmem:[#allocation8 + $0x30] sm:$0xff]
    %v83 = vld [vmem:[#allocation8 + $0x38] sm:$0xff]
    %v84 = vld [vmem:[#allocation8 + $0x40] sm:$0xff]
    %v85 = vld [vmem:[#allocation8 + $0x48] sm:$0xff]
    %v86 = vld [vmem:[#allocation8 + $0x50] sm:$0xff]
    %v87 = vld [vmem:[#allocation8 + $0x58] sm:$0xff]
    %v88 = vld [vmem:[#allocation8 + $0x60] sm:$0xff]
    %v89 = vld [vmem:[#allocation8 + $0x68] sm:$0xff]
    %v90 = vld [vmem:[#allocation8 + $0x70] sm:$0xff]
    %v91 = vld [vmem:[#allocation8 + $0x78] sm:$0xff]
    %v94 = vunpack.c.l.b16 %v74
    %v95 = vunpack.c.l.b16 %v75
    %v96 = vpack.c.b16 %v95, %v94
    %v113 = vunpack.c.l.b16 %v76
    %v114 = vunpack.c.h.b16 %v76
    %v115 = vunpack.c.l.b16 %v77
    %v116 = vunpack.c.h.b16 %v77
    %v117 = vunpack.c.l.b16 %v78
    %v118 = vunpack.c.h.b16 %v78
    %v119 = vunpack.c.l.b16 %v79
    %v120 = vunpack.c.h.b16 %v79
    %v121 = vunpack.c.l.b16 %v80
    %v122 = vunpack.c.h.b16 %v80
    %v123 = vunpack.c.l.b16 %v81
    %v124 = vunpack.c.h.b16 %v81
    %v125 = vunpack.c.l.b16 %v82
    %v126 = vunpack.c.h.b16 %v82
    %v127 = vunpack.c.l.b16 %v83
    %v128 = vunpack.c.h.b16 %v83
    %v129 = vunpack.c.l.b16 %v84
    %v130 = vunpack.c.h.b16 %v84
    %v131 = vunpack.c.l.b16 %v85
    %v132 = vunpack.c.h.b16 %v85
    %v133 = vunpack.c.l.b16 %v86
    %v134 = vunpack.c.h.b16 %v86
    %v135 = vunpack.c.l.b16 %v87
    %v136 = vunpack.c.h.b16 %v87
    %v137 = vunpack.c.l.b16 %v88
    %v138 = vunpack.c.h.b16 %v88
    %v139 = vunpack.c.l.b16 %v89
    %v140 = vunpack.c.h.b16 %v89
    %v141 = vunpack.c.l.b16 %v90
    %v142 = vunpack.c.h.b16 %v90
    %v143 = vunpack.c.l.b16 %v91
    %v144 = vunpack.c.h.b16 %v91
    %v145 = vpack.c.b16 %v121, %v113
    %v146 = vpack.c.b16 %v122, %v114
    %v147 = vpack.c.b16 %v123, %v115
    %v148 = vpack.c.b16 %v124, %v116
    %v149 = vpack.c.b16 %v125, %v117
    %v150 = vpack.c.b16 %v126, %v118
    %v151 = vpack.c.b16 %v127, %v119
    %v152 = vpack.c.b16 %v128, %v120
    %v153 = vpack.c.b16 %v137, %v129
    %v154 = vpack.c.b16 %v138, %v130
    %v155 = vpack.c.b16 %v139, %v131
    %v156 = vpack.c.b16 %v140, %v132
    %v157 = vpack.c.b16 %v141, %v133
    %v158 = vpack.c.b16 %v142, %v134
    %v159 = vpack.c.b16 %v143, %v135
    %v160 = vpack.c.b16 %v144, %v136
    %vm177 = vcmask 261120
    %v179 = vsel %vm177, %v96, 0
    %181 = vmatprep.subr.bf16.mxu0 0
    %182 = vmatpush1.bf16.msra.mxu0 0
    %183 = vmatprep.subr.bf16.mxu0 0
    %184 = vmatpush1.bf16.msra.mxu0 0
    %185 = vmatprep.subr.bf16.mxu0 0
    %186 = vmatpush1.bf16.msra.mxu0 0
    %187 = vmatprep.subr.bf16.mxu0 0
    %188 = vmatpush1.bf16.msra.mxu0 0
    %189 = vmatprep.subr.bf16.mxu0 0
    %190 = vmatpush1.bf16.msra.mxu0 0
    %191 = vmatprep.subr.bf16.mxu0 0
    %192 = vmatpush1.bf16.msra.mxu0 0
    %193 = vmatprep.subr.bf16.mxu0 %v154
    %194 = vmatpush1.bf16.msra.mxu0 %v153
    %195 = vmatprep.subr.bf16.mxu0 %v146
    %196 = vmatpush1.bf16.msra.mxu0 %v145
    %197 = vmatprep.subr.bf16.mxu0 0
    %198 = vmatpush2.bf16.msra.mxu0 0
    %199 = vmatprep.subr.bf16.mxu0 0
    %200 = vmatpush2.bf16.msra.mxu0 0
    %201 = vmatprep.subr.bf16.mxu0 0
    %202 = vmatpush2.bf16.msra.mxu0 0
    %203 = vmatprep.subr.bf16.mxu0 0
    %204 = vmatpush2.bf16.msra.mxu0 0
    %205 = vmatprep.subr.bf16.mxu0 0
    %206 = vmatpush2.bf16.msra.mxu0 0
    %207 = vmatprep.subr.bf16.mxu0 0
    %208 = vmatpush2.bf16.msra.mxu0 0
    %209 = vmatprep.subr.bf16.mxu0 0
    %210 = vmatpush2.bf16.msra.mxu0 0
    %211 = vmatprep.subr.bf16.mxu0 0
    %212 = vmatpush2.bf16.msra.mxu0 0
    %213 = vmatprep.mubr.bf16.mxu0 0
    %214 = vmatmul.mubr.bf16.gmra.mxu0 %v179
    %v215 = vpop.f32.mrf.mxu0
    %v216 = vadd.f32 0.0, %v215
    %v217 = vpop.f32.mrf.mxu0
    %v218 = vadd.f32 0.0, %v217
    %v219 = vpop.f32.mrf.mxu0
    %v220 = vadd.f32 0.0, %v219
    %v221 = vpop.f32.mrf.mxu0
    %v222 = vadd.f32 0.0, %v221
    %223 = vdwg.mxu0
    %224 = vmatprep.subr.bf16.mxu0 0
    %225 = vmatpush1.bf16.msra.mxu0 0
    %226 = vmatprep.subr.bf16.mxu0 0
    %227 = vmatpush1.bf16.msra.mxu0 0
    %228 = vmatprep.subr.bf16.mxu0 0
    %229 = vmatpush1.bf16.msra.mxu0 0
    %230 = vmatprep.subr.bf16.mxu0 0
    %231 = vmatpush1.bf16.msra.mxu0 0
    %232 = vmatprep.subr.bf16.mxu0 0
    %233 = vmatpush1.bf16.msra.mxu0 0
    %234 = vmatprep.subr.bf16.mxu0 0
    %235 = vmatpush1.bf16.msra.mxu0 0
    %236 = vmatprep.subr.bf16.mxu0 %v156
    %237 = vmatpush1.bf16.msra.mxu0 %v155
    %238 = vmatprep.subr.bf16.mxu0 %v148
    %239 = vmatpush1.bf16.msra.mxu0 %v147
    %240 = vmatprep.subr.bf16.mxu0 0
    %241 = vmatpush2.bf16.msra.mxu0 0
    %242 = vmatprep.subr.bf16.mxu0 0
    %243 = vmatpush2.bf16.msra.mxu0 0
    %244 = vmatprep.subr.bf16.mxu0 0
    %245 = vmatpush2.bf16.msra.mxu0 0
    %246 = vmatprep.subr.bf16.mxu0 0
    %247 = vmatpush2.bf16.msra.mxu0 0
    %248 = vmatprep.subr.bf16.mxu0 0
    %249 = vmatpush2.bf16.msra.mxu0 0
    %250 = vmatprep.subr.bf16.mxu0 0
    %251 = vmatpush2.bf16.msra.mxu0 0
    %252 = vmatprep.subr.bf16.mxu0 0
    %253 = vmatpush2.bf16.msra.mxu0 0
    %254 = vmatprep.subr.bf16.mxu0 0
    %255 = vmatpush2.bf16.msra.mxu0 0
    %256 = vmatprep.mubr.bf16.mxu0 0
    %257 = vmatmul.mubr.bf16.gmra.mxu0 %v179
    %v258 = vpop.f32.mrf.mxu0
    %v259 = vadd.f32 0.0, %v258
    %v260 = vpop.f32.mrf.mxu0
    %v261 = vadd.f32 0.0, %v260
    %v262 = vpop.f32.mrf.mxu0
    %v263 = vadd.f32 0.0, %v262
    %v264 = vpop.f32.mrf.mxu0
    %v265 = vadd.f32 0.0, %v264
    %266 = vdwg.mxu0
    %267 = vmatprep.subr.bf16.mxu0 0
    %268 = vmatpush1.bf16.msra.mxu0 0
    %269 = vmatprep.subr.bf16.mxu0 0
    %270 = vmatpush1.bf16.msra.mxu0 0
    %271 = vmatprep.subr.bf16.mxu0 0
    %272 = vmatpush1.bf16.msra.mxu0 0
    %273 = vmatprep.subr.bf16.mxu0 0
    %274 = vmatpush1.bf16.msra.mxu0 0
    %275 = vmatprep.subr.bf16.mxu0 0
    %276 = vmatpush1.bf16.msra.mxu0 0
    %277 = vmatprep.subr.bf16.mxu0 0
    %278 = vmatpush1.bf16.msra.mxu0 0
    %279 = vmatprep.subr.bf16.mxu0 %v158
    %280 = vmatpush1.bf16.msra.mxu0 %v157
    %281 = vmatprep.subr.bf16.mxu0 %v150
    %282 = vmatpush1.bf16.msra.mxu0 %v149
    %283 = vmatprep.subr.bf16.mxu0 0
    %284 = vmatpush2.bf16.msra.mxu0 0
    %285 = vmatprep.subr.bf16.mxu0 0
    %286 = vmatpush2.bf16.msra.mxu0 0
    %287 = vmatprep.subr.bf16.mxu0 0
    %288 = vmatpush2.bf16.msra.mxu0 0
    %289 = vmatprep.subr.bf16.mxu0 0
    %290 = vmatpush2.bf16.msra.mxu0 0
    %291 = vmatprep.subr.bf16.mxu0 0
    %292 = vmatpush2.bf16.msra.mxu0 0
    %293 = vmatprep.subr.bf16.mxu0 0
    %294 = vmatpush2.bf16.msra.mxu0 0
    %295 = vmatprep.subr.bf16.mxu0 0
    %296 = vmatpush2.bf16.msra.mxu0 0
    %297 = vmatprep.subr.bf16.mxu0 0
    %298 = vmatpush2.bf16.msra.mxu0 0
    %299 = vmatprep.mubr.bf16.mxu0 0
    %300 = vmatmul.mubr.bf16.gmra.mxu0 %v179
    %v301 = vpop.f32.mrf.mxu0
    %v302 = vadd.f32 0.0, %v301
    %v303 = vpop.f32.mrf.mxu0
    %v304 = vadd.f32 0.0, %v303
    %v305 = vpop.f32.mrf.mxu0
    %v306 = vadd.f32 0.0, %v305
    %v307 = vpop.f32.mrf.mxu0
    %v308 = vadd.f32 0.0, %v307
    %309 = vdwg.mxu0
    %310 = vmatprep.subr.bf16.mxu0 0
    %311 = vmatpush1.bf16.msra.mxu0 0
    %312 = vmatprep.subr.bf16.mxu0 0
    %313 = vmatpush1.bf16.msra.mxu0 0
    %314 = vmatprep.subr.bf16.mxu0 0
    %315 = vmatpush1.bf16.msra.mxu0 0
    %316 = vmatprep.subr.bf16.mxu0 0
    %317 = vmatpush1.bf16.msra.mxu0 0
    %318 = vmatprep.subr.bf16.mxu0 0
    %319 = vmatpush1.bf16.msra.mxu0 0
    %320 = vmatprep.subr.bf16.mxu0 0
    %321 = vmatpush1.bf16.msra.mxu0 0
    %322 = vmatprep.subr.bf16.mxu0 %v160
    %323 = vmatpush1.bf16.msra.mxu0 %v159
    %324 = vmatprep.subr.bf16.mxu0 %v152
    %325 = vmatpush1.bf16.msra.mxu0 %v151
    %326 = vmatprep.subr.bf16.mxu0 0
    %327 = vmatpush2.bf16.msra.mxu0 0
    %328 = vmatprep.subr.bf16.mxu0 0
    %329 = vmatpush2.bf16.msra.mxu0 0
    %330 = vmatprep.subr.bf16.mxu0 0
    %331 = vmatpush2.bf16.msra.mxu0 0
    %332 = vmatprep.subr.bf16.mxu0 0
    %333 = vmatpush2.bf16.msra.mxu0 0
    %334 = vmatprep.subr.bf16.mxu0 0
    %335 = vmatpush2.bf16.msra.mxu0 0
    %336 = vmatprep.subr.bf16.mxu0 0
    %337 = vmatpush2.bf16.msra.mxu0 0
    %338 = vmatprep.subr.bf16.mxu0 0
    %339 = vmatpush2.bf16.msra.mxu0 0
    %340 = vmatprep.subr.bf16.mxu0 0
    %341 = vmatpush2.bf16.msra.mxu0 0
    %342 = vmatprep.mubr.bf16.mxu0 0
    %343 = vmatmul.mubr.bf16.gmra.mxu0 %v179
    %v344 = vpop.f32.mrf.mxu0
    %v345 = vadd.f32 0.0, %v344
    %v346 = vpop.f32.mrf.mxu0
    %v347 = vadd.f32 0.0, %v346
    %v348 = vpop.f32.mrf.mxu0
    %v349 = vadd.f32 0.0, %v348
    %v350 = vpop.f32.mrf.mxu0
    %v351 = vadd.f32 0.0, %v350
    %352 = vdwg.mxu0
    %v353 = vld [vmem:[#allocation2] sm:$0xff]
    %v354 = vld [vmem:[#allocation2 + $0x8] sm:$0xff]
    %v355 = vld [vmem:[#allocation7] sm:$0xff]
    %v356 = vld [vmem:[#allocation7 + $0x8] sm:$0xff]
    %v357 = vlaneseq
    %v358 = vshrl.u32 %v357, 7
    %v359 = vsub.s32 0, %v358
    %v360 = vrot.slane %v353, %v359
    %362 = vbcast.lane.b32.xlu0 %v360, 256
    %v363 = vpop.permute.xlu0 %362
    %s365 = sor.u32 256, 8
    %366 = vbcast.lane.b32.xlu0 %v360, %s365
    %v367 = vpop.permute.xlu0 %366
    %s369 = sor.u32 256, 16
    %370 = vbcast.lane.b32.xlu0 %v360, %s369
    %v371 = vpop.permute.xlu0 %370
    %s373 = sor.u32 256, 24
    %374 = vbcast.lane.b32.xlu0 %v360, %s373
    %v375 = vpop.permute.xlu0 %374
    %v376 = vlaneseq
    %v377 = vshrl.u32 %v376, 7
    %v378 = vsub.s32 1, %v377
    %v379 = vrot.slane %v353, %v378
    %381 = vbcast.lane.b32.xlu0 %v379, 256
    %v382 = vpop.permute.xlu0 %381
    %s384 = sor.u32 256, 8
    %385 = vbcast.lane.b32.xlu0 %v379, %s384
    %v386 = vpop.permute.xlu0 %385
    %s388 = sor.u32 256, 16
    %389 = vbcast.lane.b32.xlu0 %v379, %s388
    %v390 = vpop.permute.xlu0 %389
    %s392 = sor.u32 256, 24
    %393 = vbcast.lane.b32.xlu0 %v379, %s392
    %v394 = vpop.permute.xlu0 %393
    %v395 = vlaneseq
    %v396 = vshrl.u32 %v395, 7
    %v397 = vsub.s32 2, %v396
    %v398 = vrot.slane %v353, %v397
    %400 = vbcast.lane.b32.xlu0 %v398, 256
    %v401 = vpop.permute.xlu0 %400
    %s403 = sor.u32 256, 8
    %404 = vbcast.lane.b32.xlu0 %v398, %s403
    %v405 = vpop.permute.xlu0 %404
    %s407 = sor.u32 256, 16
    %408 = vbcast.lane.b32.xlu0 %v398, %s407
    %v409 = vpop.permute.xlu0 %408
    %s411 = sor.u32 256, 24
    %412 = vbcast.lane.b32.xlu0 %v398, %s411
    %v413 = vpop.permute.xlu0 %412
    %v414 = vlaneseq
    %v415 = vshrl.u32 %v414, 7
    %v416 = vsub.s32 3, %v415
    %v417 = vrot.slane %v353, %v416
    %419 = vbcast.lane.b32.xlu0 %v417, 256
    %v420 = vpop.permute.xlu0 %419
    %s422 = sor.u32 256, 8
    %423 = vbcast.lane.b32.xlu0 %v417, %s422
    %v424 = vpop.permute.xlu0 %423
    %s426 = sor.u32 256, 16
    %427 = vbcast.lane.b32.xlu0 %v417, %s426
    %v428 = vpop.permute.xlu0 %427
    %s430 = sor.u32 256, 24
    %431 = vbcast.lane.b32.xlu0 %v417, %s430
    %v432 = vpop.permute.xlu0 %431
    %v433 = vlaneseq
    %v434 = vshrl.u32 %v433, 7
    %v435 = vsub.s32 4, %v434
    %v436 = vrot.slane %v353, %v435
    %438 = vbcast.lane.b32.xlu0 %v436, 256
    %v439 = vpop.permute.xlu0 %438
    %s441 = sor.u32 256, 8
    %442 = vbcast.lane.b32.xlu0 %v436, %s441
    %v443 = vpop.permute.xlu0 %442
    %s445 = sor.u32 256, 16
    %446 = vbcast.lane.b32.xlu0 %v436, %s445
    %v447 = vpop.permute.xlu0 %446
    %s449 = sor.u32 256, 24
    %450 = vbcast.lane.b32.xlu0 %v436, %s449
    %v451 = vpop.permute.xlu0 %450
    %v452 = vlaneseq
    %v453 = vshrl.u32 %v452, 7
    %v454 = vsub.s32 5, %v453
    %v455 = vrot.slane %v353, %v454
    %457 = vbcast.lane.b32.xlu0 %v455, 256
    %v458 = vpop.permute.xlu0 %457
    %s460 = sor.u32 256, 8
    %461 = vbcast.lane.b32.xlu0 %v455, %s460
    %v462 = vpop.permute.xlu0 %461
    %s464 = sor.u32 256, 16
    %465 = vbcast.lane.b32.xlu0 %v455, %s464
    %v466 = vpop.permute.xlu0 %465
    %s468 = sor.u32 256, 24
    %469 = vbcast.lane.b32.xlu0 %v455, %s468
    %v470 = vpop.permute.xlu0 %469
    %v471 = vlaneseq
    %v472 = vshrl.u32 %v471, 7
    %v473 = vsub.s32 6, %v472
    %v474 = vrot.slane %v353, %v473
    %476 = vbcast.lane.b32.xlu0 %v474, 256
    %v477 = vpop.permute.xlu0 %476
    %s479 = sor.u32 256, 8
    %480 = vbcast.lane.b32.xlu0 %v474, %s479
    %v481 = vpop.permute.xlu0 %480
    %s483 = sor.u32 256, 16
    %484 = vbcast.lane.b32.xlu0 %v474, %s483
    %v485 = vpop.permute.xlu0 %484
    %s487 = sor.u32 256, 24
    %488 = vbcast.lane.b32.xlu0 %v474, %s487
    %v489 = vpop.permute.xlu0 %488
    %v490 = vlaneseq
    %v491 = vshrl.u32 %v490, 7
    %v492 = vsub.s32 7, %v491
    %v493 = vrot.slane %v353, %v492
    %495 = vbcast.lane.b32.xlu0 %v493, 256
    %v496 = vpop.permute.xlu0 %495
    %s498 = sor.u32 256, 8
    %499 = vbcast.lane.b32.xlu0 %v493, %s498
    %v500 = vpop.permute.xlu0 %499
    %s502 = sor.u32 256, 16
    %503 = vbcast.lane.b32.xlu0 %v493, %s502
    %v504 = vpop.permute.xlu0 %503
    %s506 = sor.u32 256, 24
    %507 = vbcast.lane.b32.xlu0 %v493, %s506
    %v508 = vpop.permute.xlu0 %507
    %v509 = vlaneseq
    %v510 = vshrl.u32 %v509, 7
    %v511 = vsub.s32 0, %v510
    %v512 = vrot.slane %v354, %v511
    %514 = vbcast.lane.b32.xlu0 %v512, 256
    %v515 = vpop.permute.xlu0 %514
    %s517 = sor.u32 256, 8
    %518 = vbcast.lane.b32.xlu0 %v512, %s517
    %v519 = vpop.permute.xlu0 %518
    %s521 = sor.u32 256, 16
    %522 = vbcast.lane.b32.xlu0 %v512, %s521
    %v523 = vpop.permute.xlu0 %522
    %s525 = sor.u32 256, 24
    %526 = vbcast.lane.b32.xlu0 %v512, %s525
    %v527 = vpop.permute.xlu0 %526
    %v528 = vlaneseq
    %v529 = vshrl.u32 %v528, 7
    %v530 = vsub.s32 1, %v529
    %v531 = vrot.slane %v354, %v530
    %533 = vbcast.lane.b32.xlu0 %v531, 256
    %v534 = vpop.permute.xlu0 %533
    %s536 = sor.u32 256, 8
    %537 = vbcast.lane.b32.xlu0 %v531, %s536
    %v538 = vpop.permute.xlu0 %537
    %s540 = sor.u32 256, 16
    %541 = vbcast.lane.b32.xlu0 %v531, %s540
    %v542 = vpop.permute.xlu0 %541
    %s544 = sor.u32 256, 24
    %545 = vbcast.lane.b32.xlu0 %v531, %s544
    %v546 = vpop.permute.xlu0 %545
    %v547 = vlaneseq
    %v548 = vshrl.u32 %v547, 7
    %v549 = vsub.s32 2, %v548
    %v550 = vrot.slane %v354, %v549
    %552 = vbcast.lane.b32.xlu0 %v550, 256
    %v553 = vpop.permute.xlu0 %552
    %s555 = sor.u32 256, 8
    %556 = vbcast.lane.b32.xlu0 %v550, %s555
    %v557 = vpop.permute.xlu0 %556
    %s559 = sor.u32 256, 16
    %560 = vbcast.lane.b32.xlu0 %v550, %s559
    %v561 = vpop.permute.xlu0 %560
    %s563 = sor.u32 256, 24
    %564 = vbcast.lane.b32.xlu0 %v550, %s563
    %v565 = vpop.permute.xlu0 %564
    %v566 = vlaneseq
    %v567 = vshrl.u32 %v566, 7
    %v568 = vsub.s32 3, %v567
    %v569 = vrot.slane %v354, %v568
    %571 = vbcast.lane.b32.xlu0 %v569, 256
    %v572 = vpop.permute.xlu0 %571
    %s574 = sor.u32 256, 8
    %575 = vbcast.lane.b32.xlu0 %v569, %s574
    %v576 = vpop.permute.xlu0 %575
    %s578 = sor.u32 256, 16
    %579 = vbcast.lane.b32.xlu0 %v569, %s578
    %v580 = vpop.permute.xlu0 %579
    %s582 = sor.u32 256, 24
    %583 = vbcast.lane.b32.xlu0 %v569, %s582
    %v584 = vpop.permute.xlu0 %583
    %v585 = vlaneseq
    %v586 = vshrl.u32 %v585, 7
    %v587 = vsub.s32 4, %v586
    %v588 = vrot.slane %v354, %v587
    %590 = vbcast.lane.b32.xlu0 %v588, 256
    %v591 = vpop.permute.xlu0 %590
    %s593 = sor.u32 256, 8
    %594 = vbcast.lane.b32.xlu0 %v588, %s593
    %v595 = vpop.permute.xlu0 %594
    %s597 = sor.u32 256, 16
    %598 = vbcast.lane.b32.xlu0 %v588, %s597
    %v599 = vpop.permute.xlu0 %598
    %s601 = sor.u32 256, 24
    %602 = vbcast.lane.b32.xlu0 %v588, %s601
    %v603 = vpop.permute.xlu0 %602
    %v604 = vlaneseq
    %v605 = vshrl.u32 %v604, 7
    %v606 = vsub.s32 5, %v605
    %v607 = vrot.slane %v354, %v606
    %609 = vbcast.lane.b32.xlu0 %v607, 256
    %v610 = vpop.permute.xlu0 %609
    %s612 = sor.u32 256, 8
    %613 = vbcast.lane.b32.xlu0 %v607, %s612
    %v614 = vpop.permute.xlu0 %613
    %s616 = sor.u32 256, 16
    %617 = vbcast.lane.b32.xlu0 %v607, %s616
    %v618 = vpop.permute.xlu0 %617
    %s620 = sor.u32 256, 24
    %621 = vbcast.lane.b32.xlu0 %v607, %s620
    %v622 = vpop.permute.xlu0 %621
    %v623 = vlaneseq
    %v624 = vshrl.u32 %v623, 7
    %v625 = vsub.s32 6, %v624
    %v626 = vrot.slane %v354, %v625
    %628 = vbcast.lane.b32.xlu0 %v626, 256
    %v629 = vpop.permute.xlu0 %628
    %s631 = sor.u32 256, 8
    %632 = vbcast.lane.b32.xlu0 %v626, %s631
    %v633 = vpop.permute.xlu0 %632
    %s635 = sor.u32 256, 16
    %636 = vbcast.lane.b32.xlu0 %v626, %s635
    %v637 = vpop.permute.xlu0 %636
    %s639 = sor.u32 256, 24
    %640 = vbcast.lane.b32.xlu0 %v626, %s639
    %v641 = vpop.permute.xlu0 %640
    %v642 = vlaneseq
    %v643 = vshrl.u32 %v642, 7
    %v644 = vsub.s32 7, %v643
    %v645 = vrot.slane %v354, %v644
    %647 = vbcast.lane.b32.xlu0 %v645, 256
    %v648 = vpop.permute.xlu0 %647
    %s650 = sor.u32 256, 8
    %651 = vbcast.lane.b32.xlu0 %v645, %s650
    %v652 = vpop.permute.xlu0 %651
    %s654 = sor.u32 256, 16
    %655 = vbcast.lane.b32.xlu0 %v645, %s654
    %v656 = vpop.permute.xlu0 %655
    %s658 = sor.u32 256, 24
    %659 = vbcast.lane.b32.xlu0 %v645, %s658
    %v660 = vpop.permute.xlu0 %659
    %v661 = vcombine.low %v363, %v401
    %v662 = vcombine.high %v363, %v401
    %v664 = vunpack.c.l.s4 1983009808
    %v665 = vunpack.c.0.s8 %v664
    %v666 = vlaneseq
    %v667 = vshrl.u32 %v666, 7
    %v668 = vsub.s32 %v665, %v667
    %v669 = vrot.slane %v661, %v668
    %v671 = vunpack.c.l.s4 1983009808
    %v672 = vunpack.c.0.s8 %v671
    %v673 = vlaneseq
    %v674 = vshrl.u32 %v673, 7
    %v675 = vsub.s32 %v672, %v674
    %v676 = vrot.slane %v662, %v675
    %v677 = vcombine.low %v382, %v420
    %v678 = vcombine.high %v382, %v420
    %v680 = vunpack.c.l.s4 1983009808
    %v681 = vunpack.c.0.s8 %v680
    %v682 = vlaneseq
    %v683 = vshrl.u32 %v682, 7
    %v684 = vsub.s32 %v681, %v683
    %v685 = vrot.slane %v677, %v684
    %v687 = vunpack.c.l.s4 1983009808
    %v688 = vunpack.c.0.s8 %v687
    %v689 = vlaneseq
    %v690 = vshrl.u32 %v689, 7
    %v691 = vsub.s32 %v688, %v690
    %v692 = vrot.slane %v678, %v691
    %v693 = vcombine.low %v439, %v477
    %v694 = vcombine.high %v439, %v477
    %v696 = vunpack.c.l.s4 1983009808
    %v697 = vunpack.c.0.s8 %v696
    %v698 = vlaneseq
    %v699 = vshrl.u32 %v698, 7
    %v700 = vsub.s32 %v697, %v699
    %v701 = vrot.slane %v693, %v700
    %v703 = vunpack.c.l.s4 1983009808
    %v704 = vunpack.c.0.s8 %v703
    %v705 = vlaneseq
    %v706 = vshrl.u32 %v705, 7
    %v707 = vsub.s32 %v704, %v706
    %v708 = vrot.slane %v694, %v707
    %v709 = vcombine.low %v458, %v496
    %v710 = vcombine.high %v458, %v496
    %v712 = vunpack.c.l.s4 1983009808
    %v713 = vunpack.c.0.s8 %v712
    %v714 = vlaneseq
    %v715 = vshrl.u32 %v714, 7
    %v716 = vsub.s32 %v713, %v715
    %v717 = vrot.slane %v709, %v716
    %v719 = vunpack.c.l.s4 1983009808
    %v720 = vunpack.c.0.s8 %v719
    %v721 = vlaneseq
    %v722 = vshrl.u32 %v721, 7
    %v723 = vsub.s32 %v720, %v722
    %v724 = vrot.slane %v710, %v723
    %v725 = vcombine.low %v669, %v685
    %v726 = vcombine.high %v669, %v685
    %v728 = vunpack.c.l.s4 1934713408
    %v729 = vunpack.c.0.s8 %v728
    %v730 = vlaneseq
    %v731 = vshrl.u32 %v730, 7
    %v732 = vsub.s32 %v729, %v731
    %v733 = vrot.slane %v725, %v732
    %v735 = vunpack.c.l.s4 1934713408
    %v736 = vunpack.c.0.s8 %v735
    %v737 = vlaneseq
    %v738 = vshrl.u32 %v737, 7
    %v739 = vsub.s32 %v736, %v738
    %v740 = vrot.slane %v726, %v739
    %v741 = vcombine.low %v676, %v692
    %v742 = vcombine.high %v676, %v692
    %v744 = vunpack.c.l.s4 1934713408
    %v745 = vunpack.c.0.s8 %v744
    %v746 = vlaneseq
    %v747 = vshrl.u32 %v746, 7
    %v748 = vsub.s32 %v745, %v747
    %v749 = vrot.slane %v741, %v748
    %v751 = vunpack.c.l.s4 1934713408
    %v752 = vunpack.c.0.s8 %v751
    %v753 = vlaneseq
    %v754 = vshrl.u32 %v753, 7
    %v755 = vsub.s32 %v752, %v754
    %v756 = vrot.slane %v742, %v755
    %v757 = vcombine.low %v701, %v717
    %v758 = vcombine.high %v701, %v717
    %v760 = vunpack.c.l.s4 1934713408
    %v761 = vunpack.c.0.s8 %v760
    %v762 = vlaneseq
    %v763 = vshrl.u32 %v762, 7
    %v764 = vsub.s32 %v761, %v763
    %v765 = vrot.slane %v757, %v764
    %v767 = vunpack.c.l.s4 1934713408
    %v768 = vunpack.c.0.s8 %v767
    %v769 = vlaneseq
    %v770 = vshrl.u32 %v769, 7
    %v771 = vsub.s32 %v768, %v770
    %v772 = vrot.slane %v758, %v771
    %v773 = vcombine.low %v708, %v724
    %v774 = vcombine.high %v708, %v724
    %v776 = vunpack.c.l.s4 1934713408
    %v777 = vunpack.c.0.s8 %v776
    %v778 = vlaneseq
    %v779 = vshrl.u32 %v778, 7
    %v780 = vsub.s32 %v777, %v779
    %v781 = vrot.slane %v773, %v780
    %v783 = vunpack.c.l.s4 1934713408
    %v784 = vunpack.c.0.s8 %v783
    %v785 = vlaneseq
    %v786 = vshrl.u32 %v785, 7
    %v787 = vsub.s32 %v784, %v786
    %v788 = vrot.slane %v774, %v787
    %v789 = vcombine.low %v733, %v765
    %v790 = vcombine.high %v733, %v765
    %v791 = vcombine.low %v740, %v772
    %v792 = vcombine.high %v740, %v772
    %v793 = vcombine.low %v749, %v781
    %v794 = vcombine.high %v749, %v781
    %v795 = vcombine.low %v756, %v788
    %v796 = vcombine.high %v756, %v788
    %v797 = vcombine.low %v515, %v553
    %v798 = vcombine.high %v515, %v553
    %v800 = vunpack.c.l.s4 1983009808
    %v801 = vunpack.c.0.s8 %v800
    %v802 = vlaneseq
    %v803 = vshrl.u32 %v802, 7
    %v804 = vsub.s32 %v801, %v803
    %v805 = vrot.slane %v797, %v804
    %v807 = vunpack.c.l.s4 1983009808
    %v808 = vunpack.c.0.s8 %v807
    %v809 = vlaneseq
    %v810 = vshrl.u32 %v809, 7
    %v811 = vsub.s32 %v808, %v810
    %v812 = vrot.slane %v798, %v811
    %v813 = vcombine.low %v534, %v572
    %v814 = vcombine.high %v534, %v572
    %v816 = vunpack.c.l.s4 1983009808
    %v817 = vunpack.c.0.s8 %v816
    %v818 = vlaneseq
    %v819 = vshrl.u32 %v818, 7
    %v820 = vsub.s32 %v817, %v819
    %v821 = vrot.slane %v813, %v820
    %v823 = vunpack.c.l.s4 1983009808
    %v824 = vunpack.c.0.s8 %v823
    %v825 = vlaneseq
    %v826 = vshrl.u32 %v825, 7
    %v827 = vsub.s32 %v824, %v826
    %v828 = vrot.slane %v814, %v827
    %v829 = vcombine.low %v591, %v629
    %v830 = vcombine.high %v591, %v629
    %v832 = vunpack.c.l.s4 1983009808
    %v833 = vunpack.c.0.s8 %v832
    %v834 = vlaneseq
    %v835 = vshrl.u32 %v834, 7
    %v836 = vsub.s32 %v833, %v835
    %v837 = vrot.slane %v829, %v836
    %v839 = vunpack.c.l.s4 1983009808
    %v840 = vunpack.c.0.s8 %v839
    %v841 = vlaneseq
    %v842 = vshrl.u32 %v841, 7
    %v843 = vsub.s32 %v840, %v842
    %v844 = vrot.slane %v830, %v843
    %v845 = vcombine.low %v610, %v648
    %v846 = vcombine.high %v610, %v648
    %v848 = vunpack.c.l.s4 1983009808
    %v849 = vunpack.c.0.s8 %v848
    %v850 = vlaneseq
    %v851 = vshrl.u32 %v850, 7
    %v852 = vsub.s32 %v849, %v851
    %v853 = vrot.slane %v845, %v852
    %v855 = vunpack.c.l.s4 1983009808
    %v856 = vunpack.c.0.s8 %v855
    %v857 = vlaneseq
    %v858 = vshrl.u32 %v857, 7
    %v859 = vsub.s32 %v856, %v858
    %v860 = vrot.slane %v846, %v859
    %v861 = vcombine.low %v805, %v821
    %v862 = vcombine.high %v805, %v821
    %v864 = vunpack.c.l.s4 1934713408
    %v865 = vunpack.c.0.s8 %v864
    %v866 = vlaneseq
    %v867 = vshrl.u32 %v866, 7
    %v868 = vsub.s32 %v865, %v867
    %v869 = vrot.slane %v861, %v868
    %v871 = vunpack.c.l.s4 1934713408
    %v872 = vunpack.c.0.s8 %v871
    %v873 = vlaneseq
    %v874 = vshrl.u32 %v873, 7
    %v875 = vsub.s32 %v872, %v874
    %v876 = vrot.slane %v862, %v875
    %v877 = vcombine.low %v812, %v828
    %v878 = vcombine.high %v812, %v828
    %v880 = vunpack.c.l.s4 1934713408
    %v881 = vunpack.c.0.s8 %v880
    %v882 = vlaneseq
    %v883 = vshrl.u32 %v882, 7
    %v884 = vsub.s32 %v881, %v883
    %v885 = vrot.slane %v877, %v884
    %v887 = vunpack.c.l.s4 1934713408
    %v888 = vunpack.c.0.s8 %v887
    %v889 = vlaneseq
    %v890 = vshrl.u32 %v889, 7
    %v891 = vsub.s32 %v888, %v890
    %v892 = vrot.slane %v878, %v891
    %v893 = vcombine.low %v837, %v853
    %v894 = vcombine.high %v837, %v853
    %v896 = vunpack.c.l.s4 1934713408
    %v897 = vunpack.c.0.s8 %v896
    %v898 = vlaneseq
    %v899 = vshrl.u32 %v898, 7
    %v900 = vsub.s32 %v897, %v899
    %v901 = vrot.slane %v893, %v900
    %v903 = vunpack.c.l.s4 1934713408
    %v904 = vunpack.c.0.s8 %v903
    %v905 = vlaneseq
    %v906 = vshrl.u32 %v905, 7
    %v907 = vsub.s32 %v904, %v906
    %v908 = vrot.slane %v894, %v907
    %v909 = vcombine.low %v844, %v860
    %v910 = vcombine.high %v844, %v860
    %v912 = vunpack.c.l.s4 1934713408
    %v913 = vunpack.c.0.s8 %v912
    %v914 = vlaneseq
    %v915 = vshrl.u32 %v914, 7
    %v916 = vsub.s32 %v913, %v915
    %v917 = vrot.slane %v909, %v916
    %v919 = vunpack.c.l.s4 1934713408
    %v920 = vunpack.c.0.s8 %v919
    %v921 = vlaneseq
    %v922 = vshrl.u32 %v921, 7
    %v923 = vsub.s32 %v920, %v922
    %v924 = vrot.slane %v910, %v923
    %v925 = vcombine.low %v869, %v901
    %v926 = vcombine.high %v869, %v901
    %v927 = vcombine.low %v876, %v908
    %v928 = vcombine.high %v876, %v908
    %v929 = vcombine.low %v885, %v917
    %v930 = vcombine.high %v885, %v917
    %v931 = vcombine.low %v892, %v924
    %v932 = vcombine.high %v892, %v924
    %v933 = vcombine.low %v367, %v405
    %v934 = vcombine.high %v367, %v405
    %v936 = vunpack.c.l.s4 1983009808
    %v937 = vunpack.c.0.s8 %v936
    %v938 = vlaneseq
    %v939 = vshrl.u32 %v938, 7
    %v940 = vsub.s32 %v937, %v939
    %v941 = vrot.slane %v933, %v940
    %v943 = vunpack.c.l.s4 1983009808
    %v944 = vunpack.c.0.s8 %v943
    %v945 = vlaneseq
    %v946 = vshrl.u32 %v945, 7
    %v947 = vsub.s32 %v944, %v946
    %v948 = vrot.slane %v934, %v947
    %v949 = vcombine.low %v386, %v424
    %v950 = vcombine.high %v386, %v424
    %v952 = vunpack.c.l.s4 1983009808
    %v953 = vunpack.c.0.s8 %v952
    %v954 = vlaneseq
    %v955 = vshrl.u32 %v954, 7
    %v956 = vsub.s32 %v953, %v955
    %v957 = vrot.slane %v949, %v956
    %v959 = vunpack.c.l.s4 1983009808
    %v960 = vunpack.c.0.s8 %v959
    %v961 = vlaneseq
    %v962 = vshrl.u32 %v961, 7
    %v963 = vsub.s32 %v960, %v962
    %v964 = vrot.slane %v950, %v963
    %v965 = vcombine.low %v443, %v481
    %v966 = vcombine.high %v443, %v481
    %v968 = vunpack.c.l.s4 1983009808
    %v969 = vunpack.c.0.s8 %v968
    %v970 = vlaneseq
    %v971 = vshrl.u32 %v970, 7
    %v972 = vsub.s32 %v969, %v971
    %v973 = vrot.slane %v965, %v972
    %v975 = vunpack.c.l.s4 1983009808
    %v976 = vunpack.c.0.s8 %v975
    %v977 = vlaneseq
    %v978 = vshrl.u32 %v977, 7
    %v979 = vsub.s32 %v976, %v978
    %v980 = vrot.slane %v966, %v979
    %v981 = vcombine.low %v462, %v500
    %v982 = vcombine.high %v462, %v500
    %v984 = vunpack.c.l.s4 1983009808
    %v985 = vunpack.c.0.s8 %v984
    %v986 = vlaneseq
    %v987 = vshrl.u32 %v986, 7
    %v988 = vsub.s32 %v985, %v987
    %v989 = vrot.slane %v981, %v988
    %v991 = vunpack.c.l.s4 1983009808
    %v992 = vunpack.c.0.s8 %v991
    %v993 = vlaneseq
    %v994 = vshrl.u32 %v993, 7
    %v995 = vsub.s32 %v992, %v994
    %v996 = vrot.slane %v982, %v995
    %v997 = vcombine.low %v941, %v957
    %v998 = vcombine.high %v941, %v957
    %v1000 = vunpack.c.l.s4 1934713408
    %v1001 = vunpack.c.0.s8 %v1000
    %v1002 = vlaneseq
    %v1003 = vshrl.u32 %v1002, 7
    %v1004 = vsub.s32 %v1001, %v1003
    %v1005 = vrot.slane %v997, %v1004
    %v1007 = vunpack.c.l.s4 1934713408
    %v1008 = vunpack.c.0.s8 %v1007
    %v1009 = vlaneseq
    %v1010 = vshrl.u32 %v1009, 7
    %v1011 = vsub.s32 %v1008, %v1010
    %v1012 = vrot.slane %v998, %v1011
    %v1013 = vcombine.low %v948, %v964
    %v1014 = vcombine.high %v948, %v964
    %v1016 = vunpack.c.l.s4 1934713408
    %v1017 = vunpack.c.0.s8 %v1016
    %v1018 = vlaneseq
    %v1019 = vshrl.u32 %v1018, 7
    %v1020 = vsub.s32 %v1017, %v1019
    %v1021 = vrot.slane %v1013, %v1020
    %v1023 = vunpack.c.l.s4 1934713408
    %v1024 = vunpack.c.0.s8 %v1023
    %v1025 = vlaneseq
    %v1026 = vshrl.u32 %v1025, 7
    %v1027 = vsub.s32 %v1024, %v1026
    %v1028 = vrot.slane %v1014, %v1027
    %v1029 = vcombine.low %v973, %v989
    %v1030 = vcombine.high %v973, %v989
    %v1032 = vunpack.c.l.s4 1934713408
    %v1033 = vunpack.c.0.s8 %v1032
    %v1034 = vlaneseq
    %v1035 = vshrl.u32 %v1034, 7
    %v1036 = vsub.s32 %v1033, %v1035
    %v1037 = vrot.slane %v1029, %v1036
    %v1039 = vunpack.c.l.s4 1934713408
    %v1040 = vunpack.c.0.s8 %v1039
    %v1041 = vlaneseq
    %v1042 = vshrl.u32 %v1041, 7
    %v1043 = vsub.s32 %v1040, %v1042
    %v1044 = vrot.slane %v1030, %v1043
    %v1045 = vcombine.low %v980, %v996
    %v1046 = vcombine.high %v980, %v996
    %v1048 = vunpack.c.l.s4 1934713408
    %v1049 = vunpack.c.0.s8 %v1048
    %v1050 = vlaneseq
    %v1051 = vshrl.u32 %v1050, 7
    %v1052 = vsub.s32 %v1049, %v1051
    %v1053 = vrot.slane %v1045, %v1052
    %v1055 = vunpack.c.l.s4 1934713408
    %v1056 = vunpack.c.0.s8 %v1055
    %v1057 = vlaneseq
    %v1058 = vshrl.u32 %v1057, 7
    %v1059 = vsub.s32 %v1056, %v1058
    %v1060 = vrot.slane %v1046, %v1059
    %v1061 = vcombine.low %v1005, %v1037
    %v1062 = vcombine.high %v1005, %v1037
    %v1063 = vcombine.low %v1012, %v1044
    %v1064 = vcombine.high %v1012, %v1044
    %v1065 = vcombine.low %v1021, %v1053
    %v1066 = vcombine.high %v1021, %v1053
    %v1067 = vcombine.low %v1028, %v1060
    %v1068 = vcombine.high %v1028, %v1060
    %v1069 = vcombine.low %v519, %v557
    %v1070 = vcombine.high %v519, %v557
    %v1072 = vunpack.c.l.s4 1983009808
    %v1073 = vunpack.c.0.s8 %v1072
    %v1074 = vlaneseq
    %v1075 = vshrl.u32 %v1074, 7
    %v1076 = vsub.s32 %v1073, %v1075
    %v1077 = vrot.slane %v1069, %v1076
    %v1079 = vunpack.c.l.s4 1983009808
    %v1080 = vunpack.c.0.s8 %v1079
    %v1081 = vlaneseq
    %v1082 = vshrl.u32 %v1081, 7
    %v1083 = vsub.s32 %v1080, %v1082
    %v1084 = vrot.slane %v1070, %v1083
    %v1085 = vcombine.low %v538, %v576
    %v1086 = vcombine.high %v538, %v576
    %v1088 = vunpack.c.l.s4 1983009808
    %v1089 = vunpack.c.0.s8 %v1088
    %v1090 = vlaneseq
    %v1091 = vshrl.u32 %v1090, 7
    %v1092 = vsub.s32 %v1089, %v1091
    %v1093 = vrot.slane %v1085, %v1092
    %v1095 = vunpack.c.l.s4 1983009808
    %v1096 = vunpack.c.0.s8 %v1095
    %v1097 = vlaneseq
    %v1098 = vshrl.u32 %v1097, 7
    %v1099 = vsub.s32 %v1096, %v1098
    %v1100 = vrot.slane %v1086, %v1099
    %v1101 = vcombine.low %v595, %v633
    %v1102 = vcombine.high %v595, %v633
    %v1104 = vunpack.c.l.s4 1983009808
    %v1105 = vunpack.c.0.s8 %v1104
    %v1106 = vlaneseq
    %v1107 = vshrl.u32 %v1106, 7
    %v1108 = vsub.s32 %v1105, %v1107
    %v1109 = vrot.slane %v1101, %v1108
    %v1111 = vunpack.c.l.s4 1983009808
    %v1112 = vunpack.c.0.s8 %v1111
    %v1113 = vlaneseq
    %v1114 = vshrl.u32 %v1113, 7
    %v1115 = vsub.s32 %v1112, %v1114
    %v1116 = vrot.slane %v1102, %v1115
    %v1117 = vcombine.low %v614, %v652
    %v1118 = vcombine.high %v614, %v652
    %v1120 = vunpack.c.l.s4 1983009808
    %v1121 = vunpack.c.0.s8 %v1120
    %v1122 = vlaneseq
    %v1123 = vshrl.u32 %v1122, 7
    %v1124 = vsub.s32 %v1121, %v1123
    %v1125 = vrot.slane %v1117, %v1124
    %v1127 = vunpack.c.l.s4 1983009808
    %v1128 = vunpack.c.0.s8 %v1127
    %v1129 = vlaneseq
    %v1130 = vshrl.u32 %v1129, 7
    %v1131 = vsub.s32 %v1128, %v1130
    %v1132 = vrot.slane %v1118, %v1131
    %v1133 = vcombine.low %v1077, %v1093
    %v1134 = vcombine.high %v1077, %v1093
    %v1136 = vunpack.c.l.s4 1934713408
    %v1137 = vunpack.c.0.s8 %v1136
    %v1138 = vlaneseq
    %v1139 = vshrl.u32 %v1138, 7
    %v1140 = vsub.s32 %v1137, %v1139
    %v1141 = vrot.slane %v1133, %v1140
    %v1143 = vunpack.c.l.s4 1934713408
    %v1144 = vunpack.c.0.s8 %v1143
    %v1145 = vlaneseq
    %v1146 = vshrl.u32 %v1145, 7
    %v1147 = vsub.s32 %v1144, %v1146
    %v1148 = vrot.slane %v1134, %v1147
    %v1149 = vcombine.low %v1084, %v1100
    %v1150 = vcombine.high %v1084, %v1100
    %v1152 = vunpack.c.l.s4 1934713408
    %v1153 = vunpack.c.0.s8 %v1152
    %v1154 = vlaneseq
    %v1155 = vshrl.u32 %v1154, 7
    %v1156 = vsub.s32 %v1153, %v1155
    %v1157 = vrot.slane %v1149, %v1156
    %v1159 = vunpack.c.l.s4 1934713408
    %v1160 = vunpack.c.0.s8 %v1159
    %v1161 = vlaneseq
    %v1162 = vshrl.u32 %v1161, 7
    %v1163 = vsub.s32 %v1160, %v1162
    %v1164 = vrot.slane %v1150, %v1163
    %v1165 = vcombine.low %v1109, %v1125
    %v1166 = vcombine.high %v1109, %v1125
    %v1168 = vunpack.c.l.s4 1934713408
    %v1169 = vunpack.c.0.s8 %v1168
    %v1170 = vlaneseq
    %v1171 = vshrl.u32 %v1170, 7
    %v1172 = vsub.s32 %v1169, %v1171
    %v1173 = vrot.slane %v1165, %v1172
    %v1175 = vunpack.c.l.s4 1934713408
    %v1176 = vunpack.c.0.s8 %v1175
    %v1177 = vlaneseq
    %v1178 = vshrl.u32 %v1177, 7
    %v1179 = vsub.s32 %v1176, %v1178
    %v1180 = vrot.slane %v1166, %v1179
    %v1181 = vcombine.low %v1116, %v1132
    %v1182 = vcombine.high %v1116, %v1132
    %v1184 = vunpack.c.l.s4 1934713408
    %v1185 = vunpack.c.0.s8 %v1184
    %v1186 = vlaneseq
    %v1187 = vshrl.u32 %v1186, 7
    %v1188 = vsub.s32 %v1185, %v1187
    %v1189 = vrot.slane %v1181, %v1188
    %v1191 = vunpack.c.l.s4 1934713408
    %v1192 = vunpack.c.0.s8 %v1191
    %v1193 = vlaneseq
    %v1194 = vshrl.u32 %v1193, 7
    %v1195 = vsub.s32 %v1192, %v1194
    %v1196 = vrot.slane %v1182, %v1195
    %v1197 = vcombine.low %v1141, %v1173
    %v1198 = vcombine.high %v1141, %v1173
    %v1199 = vcombine.low %v1148, %v1180
    %v1200 = vcombine.high %v1148, %v1180
    %v1201 = vcombine.low %v1157, %v1189
    %v1202 = vcombine.high %v1157, %v1189
    %v1203 = vcombine.low %v1164, %v1196
    %v1204 = vcombine.high %v1164, %v1196
    %v1205 = vcombine.low %v371, %v409
    %v1206 = vcombine.high %v371, %v409
    %v1208 = vunpack.c.l.s4 1983009808
    %v1209 = vunpack.c.0.s8 %v1208
    %v1210 = vlaneseq
    %v1211 = vshrl.u32 %v1210, 7
    %v1212 = vsub.s32 %v1209, %v1211
    %v1213 = vrot.slane %v1205, %v1212
    %v1215 = vunpack.c.l.s4 1983009808
    %v1216 = vunpack.c.0.s8 %v1215
    %v1217 = vlaneseq
    %v1218 = vshrl.u32 %v1217, 7
    %v1219 = vsub.s32 %v1216, %v1218
    %v1220 = vrot.slane %v1206, %v1219
    %v1221 = vcombine.low %v390, %v428
    %v1222 = vcombine.high %v390, %v428
    %v1224 = vunpack.c.l.s4 1983009808
    %v1225 = vunpack.c.0.s8 %v1224
    %v1226 = vlaneseq
    %v1227 = vshrl.u32 %v1226, 7
    %v1228 = vsub.s32 %v1225, %v1227
    %v1229 = vrot.slane %v1221, %v1228
    %v1231 = vunpack.c.l.s4 1983009808
    %v1232 = vunpack.c.0.s8 %v1231
    %v1233 = vlaneseq
    %v1234 = vshrl.u32 %v1233, 7
    %v1235 = vsub.s32 %v1232, %v1234
    %v1236 = vrot.slane %v1222, %v1235
    %v1237 = vcombine.low %v447, %v485
    %v1238 = vcombine.high %v447, %v485
    %v1240 = vunpack.c.l.s4 1983009808
    %v1241 = vunpack.c.0.s8 %v1240
    %v1242 = vlaneseq
    %v1243 = vshrl.u32 %v1242, 7
    %v1244 = vsub.s32 %v1241, %v1243
    %v1245 = vrot.slane %v1237, %v1244
    %v1247 = vunpack.c.l.s4 1983009808
    %v1248 = vunpack.c.0.s8 %v1247
    %v1249 = vlaneseq
    %v1250 = vshrl.u32 %v1249, 7
    %v1251 = vsub.s32 %v1248, %v1250
    %v1252 = vrot.slane %v1238, %v1251
    %v1253 = vcombine.low %v466, %v504
    %v1254 = vcombine.high %v466, %v504
    %v1256 = vunpack.c.l.s4 1983009808
    %v1257 = vunpack.c.0.s8 %v1256
    %v1258 = vlaneseq
    %v1259 = vshrl.u32 %v1258, 7
    %v1260 = vsub.s32 %v1257, %v1259
    %v1261 = vrot.slane %v1253, %v1260
    %v1263 = vunpack.c.l.s4 1983009808
    %v1264 = vunpack.c.0.s8 %v1263
    %v1265 = vlaneseq
    %v1266 = vshrl.u32 %v1265, 7
    %v1267 = vsub.s32 %v1264, %v1266
    %v1268 = vrot.slane %v1254, %v1267
    %v1269 = vcombine.low %v1213, %v1229
    %v1270 = vcombine.high %v1213, %v1229
    %v1272 = vunpack.c.l.s4 1934713408
    %v1273 = vunpack.c.0.s8 %v1272
    %v1274 = vlaneseq
    %v1275 = vshrl.u32 %v1274, 7
    %v1276 = vsub.s32 %v1273, %v1275
    %v1277 = vrot.slane %v1269, %v1276
    %v1279 = vunpack.c.l.s4 1934713408
    %v1280 = vunpack.c.0.s8 %v1279
    %v1281 = vlaneseq
    %v1282 = vshrl.u32 %v1281, 7
    %v1283 = vsub.s32 %v1280, %v1282
    %v1284 = vrot.slane %v1270, %v1283
    %v1285 = vcombine.low %v1220, %v1236
    %v1286 = vcombine.high %v1220, %v1236
    %v1288 = vunpack.c.l.s4 1934713408
    %v1289 = vunpack.c.0.s8 %v1288
    %v1290 = vlaneseq
    %v1291 = vshrl.u32 %v1290, 7
    %v1292 = vsub.s32 %v1289, %v1291
    %v1293 = vrot.slane %v1285, %v1292
    %v1295 = vunpack.c.l.s4 1934713408
    %v1296 = vunpack.c.0.s8 %v1295
    %v1297 = vlaneseq
    %v1298 = vshrl.u32 %v1297, 7
    %v1299 = vsub.s32 %v1296, %v1298
    %v1300 = vrot.slane %v1286, %v1299
    %v1301 = vcombine.low %v1245, %v1261
    %v1302 = vcombine.high %v1245, %v1261
    %v1304 = vunpack.c.l.s4 1934713408
    %v1305 = vunpack.c.0.s8 %v1304
    %v1306 = vlaneseq
    %v1307 = vshrl.u32 %v1306, 7
    %v1308 = vsub.s32 %v1305, %v1307
    %v1309 = vrot.slane %v1301, %v1308
    %v1311 = vunpack.c.l.s4 1934713408
    %v1312 = vunpack.c.0.s8 %v1311
    %v1313 = vlaneseq
    %v1314 = vshrl.u32 %v1313, 7
    %v1315 = vsub.s32 %v1312, %v1314
    %v1316 = vrot.slane %v1302, %v1315
    %v1317 = vcombine.low %v1252, %v1268
    %v1318 = vcombine.high %v1252, %v1268
    %v1320 = vunpack.c.l.s4 1934713408
    %v1321 = vunpack.c.0.s8 %v1320
    %v1322 = vlaneseq
    %v1323 = vshrl.u32 %v1322, 7
    %v1324 = vsub.s32 %v1321, %v1323
    %v1325 = vrot.slane %v1317, %v1324
    %v1327 = vunpack.c.l.s4 1934713408
    %v1328 = vunpack.c.0.s8 %v1327
    %v1329 = vlaneseq
    %v1330 = vshrl.u32 %v1329, 7
    %v1331 = vsub.s32 %v1328, %v1330
    %v1332 = vrot.slane %v1318, %v1331
    %v1333 = vcombine.low %v1277, %v1309
    %v1334 = vcombine.high %v1277, %v1309
    %v1335 = vcombine.low %v1284, %v1316
    %v1336 = vcombine.high %v1284, %v1316
    %v1337 = vcombine.low %v1293, %v1325
    %v1338 = vcombine.high %v1293, %v1325
    %v1339 = vcombine.low %v1300, %v1332
    %v1340 = vcombine.high %v1300, %v1332
    %v1341 = vcombine.low %v523, %v561
    %v1342 = vcombine.high %v523, %v561
    %v1344 = vunpack.c.l.s4 1983009808
    %v1345 = vunpack.c.0.s8 %v1344
    %v1346 = vlaneseq
    %v1347 = vshrl.u32 %v1346, 7
    %v1348 = vsub.s32 %v1345, %v1347
    %v1349 = vrot.slane %v1341, %v1348
    %v1351 = vunpack.c.l.s4 1983009808
    %v1352 = vunpack.c.0.s8 %v1351
    %v1353 = vlaneseq
    %v1354 = vshrl.u32 %v1353, 7
    %v1355 = vsub.s32 %v1352, %v1354
    %v1356 = vrot.slane %v1342, %v1355
    %v1357 = vcombine.low %v542, %v580
    %v1358 = vcombine.high %v542, %v580
    %v1360 = vunpack.c.l.s4 1983009808
    %v1361 = vunpack.c.0.s8 %v1360
    %v1362 = vlaneseq
    %v1363 = vshrl.u32 %v1362, 7
    %v1364 = vsub.s32 %v1361, %v1363
    %v1365 = vrot.slane %v1357, %v1364
    %v1367 = vunpack.c.l.s4 1983009808
    %v1368 = vunpack.c.0.s8 %v1367
    %v1369 = vlaneseq
    %v1370 = vshrl.u32 %v1369, 7
    %v1371 = vsub.s32 %v1368, %v1370
    %v1372 = vrot.slane %v1358, %v1371
    %v1373 = vcombine.low %v599, %v637
    %v1374 = vcombine.high %v599, %v637
    %v1376 = vunpack.c.l.s4 1983009808
    %v1377 = vunpack.c.0.s8 %v1376
    %v1378 = vlaneseq
    %v1379 = vshrl.u32 %v1378, 7
    %v1380 = vsub.s32 %v1377, %v1379
    %v1381 = vrot.slane %v1373, %v1380
    %v1383 = vunpack.c.l.s4 1983009808
    %v1384 = vunpack.c.0.s8 %v1383
    %v1385 = vlaneseq
    %v1386 = vshrl.u32 %v1385, 7
    %v1387 = vsub.s32 %v1384, %v1386
    %v1388 = vrot.slane %v1374, %v1387
    %v1389 = vcombine.low %v618, %v656
    %v1390 = vcombine.high %v618, %v656
    %v1392 = vunpack.c.l.s4 1983009808
    %v1393 = vunpack.c.0.s8 %v1392
    %v1394 = vlaneseq
    %v1395 = vshrl.u32 %v1394, 7
    %v1396 = vsub.s32 %v1393, %v1395
    %v1397 = vrot.slane %v1389, %v1396
    %v1399 = vunpack.c.l.s4 1983009808
    %v1400 = vunpack.c.0.s8 %v1399
    %v1401 = vlaneseq
    %v1402 = vshrl.u32 %v1401, 7
    %v1403 = vsub.s32 %v1400, %v1402
    %v1404 = vrot.slane %v1390, %v1403
    %v1405 = vcombine.low %v1349, %v1365
    %v1406 = vcombine.high %v1349, %v1365
    %v1408 = vunpack.c.l.s4 1934713408
    %v1409 = vunpack.c.0.s8 %v1408
    %v1410 = vlaneseq
    %v1411 = vshrl.u32 %v1410, 7
    %v1412 = vsub.s32 %v1409, %v1411
    %v1413 = vrot.slane %v1405, %v1412
    %v1415 = vunpack.c.l.s4 1934713408
    %v1416 = vunpack.c.0.s8 %v1415
    %v1417 = vlaneseq
    %v1418 = vshrl.u32 %v1417, 7
    %v1419 = vsub.s32 %v1416, %v1418
    %v1420 = vrot.slane %v1406, %v1419
    %v1421 = vcombine.low %v1356, %v1372
    %v1422 = vcombine.high %v1356, %v1372
    %v1424 = vunpack.c.l.s4 1934713408
    %v1425 = vunpack.c.0.s8 %v1424
    %v1426 = vlaneseq
    %v1427 = vshrl.u32 %v1426, 7
    %v1428 = vsub.s32 %v1425, %v1427
    %v1429 = vrot.slane %v1421, %v1428
    %v1431 = vunpack.c.l.s4 1934713408
    %v1432 = vunpack.c.0.s8 %v1431
    %v1433 = vlaneseq
    %v1434 = vshrl.u32 %v1433, 7
    %v1435 = vsub.s32 %v1432, %v1434
    %v1436 = vrot.slane %v1422, %v1435
    %v1437 = vcombine.low %v1381, %v1397
    %v1438 = vcombine.high %v1381, %v1397
    %v1440 = vunpack.c.l.s4 1934713408
    %v1441 = vunpack.c.0.s8 %v1440
    %v1442 = vlaneseq
    %v1443 = vshrl.u32 %v1442, 7
    %v1444 = vsub.s32 %v1441, %v1443
    %v1445 = vrot.slane %v1437, %v1444
    %v1447 = vunpack.c.l.s4 1934713408
    %v1448 = vunpack.c.0.s8 %v1447
    %v1449 = vlaneseq
    %v1450 = vshrl.u32 %v1449, 7
    %v1451 = vsub.s32 %v1448, %v1450
    %v1452 = vrot.slane %v1438, %v1451
    %v1453 = vcombine.low %v1388, %v1404
    %v1454 = vcombine.high %v1388, %v1404
    %v1456 = vunpack.c.l.s4 1934713408
    %v1457 = vunpack.c.0.s8 %v1456
    %v1458 = vlaneseq
    %v1459 = vshrl.u32 %v1458, 7
    %v1460 = vsub.s32 %v1457, %v1459
    %v1461 = vrot.slane %v1453, %v1460
    %v1463 = vunpack.c.l.s4 1934713408
    %v1464 = vunpack.c.0.s8 %v1463
    %v1465 = vlaneseq
    %v1466 = vshrl.u32 %v1465, 7
    %v1467 = vsub.s32 %v1464, %v1466
    %v1468 = vrot.slane %v1454, %v1467
    %v1469 = vcombine.low %v1413, %v1445
    %v1470 = vcombine.high %v1413, %v1445
    %v1471 = vcombine.low %v1420, %v1452
    %v1472 = vcombine.high %v1420, %v1452
    %v1473 = vcombine.low %v1429, %v1461
    %v1474 = vcombine.high %v1429, %v1461
    %v1475 = vcombine.low %v1436, %v1468
    %v1476 = vcombine.high %v1436, %v1468
    %v1477 = vcombine.low %v375, %v413
    %v1478 = vcombine.high %v375, %v413
    %v1480 = vunpack.c.l.s4 1983009808
    %v1481 = vunpack.c.0.s8 %v1480
    %v1482 = vlaneseq
    %v1483 = vshrl.u32 %v1482, 7
    %v1484 = vsub.s32 %v1481, %v1483
    %v1485 = vrot.slane %v1477, %v1484
    %v1487 = vunpack.c.l.s4 1983009808
    %v1488 = vunpack.c.0.s8 %v1487
    %v1489 = vlaneseq
    %v1490 = vshrl.u32 %v1489, 7
    %v1491 = vsub.s32 %v1488, %v1490
    %v1492 = vrot.slane %v1478, %v1491
    %v1493 = vcombine.low %v394, %v432
    %v1494 = vcombine.high %v394, %v432
    %v1496 = vunpack.c.l.s4 1983009808
    %v1497 = vunpack.c.0.s8 %v1496
    %v1498 = vlaneseq
    %v1499 = vshrl.u32 %v1498, 7
    %v1500 = vsub.s32 %v1497, %v1499
    %v1501 = vrot.slane %v1493, %v1500
    %v1503 = vunpack.c.l.s4 1983009808
    %v1504 = vunpack.c.0.s8 %v1503
    %v1505 = vlaneseq
    %v1506 = vshrl.u32 %v1505, 7
    %v1507 = vsub.s32 %v1504, %v1506
    %v1508 = vrot.slane %v1494, %v1507
    %v1509 = vcombine.low %v451, %v489
    %v1510 = vcombine.high %v451, %v489
    %v1512 = vunpack.c.l.s4 1983009808
    %v1513 = vunpack.c.0.s8 %v1512
    %v1514 = vlaneseq
    %v1515 = vshrl.u32 %v1514, 7
    %v1516 = vsub.s32 %v1513, %v1515
    %v1517 = vrot.slane %v1509, %v1516
    %v1519 = vunpack.c.l.s4 1983009808
    %v1520 = vunpack.c.0.s8 %v1519
    %v1521 = vlaneseq
    %v1522 = vshrl.u32 %v1521, 7
    %v1523 = vsub.s32 %v1520, %v1522
    %v1524 = vrot.slane %v1510, %v1523
    %v1525 = vcombine.low %v470, %v508
    %v1526 = vcombine.high %v470, %v508
    %v1528 = vunpack.c.l.s4 1983009808
    %v1529 = vunpack.c.0.s8 %v1528
    %v1530 = vlaneseq
    %v1531 = vshrl.u32 %v1530, 7
    %v1532 = vsub.s32 %v1529, %v1531
    %v1533 = vrot.slane %v1525, %v1532
    %v1535 = vunpack.c.l.s4 1983009808
    %v1536 = vunpack.c.0.s8 %v1535
    %v1537 = vlaneseq
    %v1538 = vshrl.u32 %v1537, 7
    %v1539 = vsub.s32 %v1536, %v1538
    %v1540 = vrot.slane %v1526, %v1539
    %v1541 = vcombine.low %v1485, %v1501
    %v1542 = vcombine.high %v1485, %v1501
    %v1544 = vunpack.c.l.s4 1934713408
    %v1545 = vunpack.c.0.s8 %v1544
    %v1546 = vlaneseq
    %v1547 = vshrl.u32 %v1546, 7
    %v1548 = vsub.s32 %v1545, %v1547
    %v1549 = vrot.slane %v1541, %v1548
    %v1551 = vunpack.c.l.s4 1934713408
    %v1552 = vunpack.c.0.s8 %v1551
    %v1553 = vlaneseq
    %v1554 = vshrl.u32 %v1553, 7
    %v1555 = vsub.s32 %v1552, %v1554
    %v1556 = vrot.slane %v1542, %v1555
    %v1557 = vcombine.low %v1492, %v1508
    %v1558 = vcombine.high %v1492, %v1508
    %v1560 = vunpack.c.l.s4 1934713408
    %v1561 = vunpack.c.0.s8 %v1560
    %v1562 = vlaneseq
    %v1563 = vshrl.u32 %v1562, 7
    %v1564 = vsub.s32 %v1561, %v1563
    %v1565 = vrot.slane %v1557, %v1564
    %v1567 = vunpack.c.l.s4 1934713408
    %v1568 = vunpack.c.0.s8 %v1567
    %v1569 = vlaneseq
    %v1570 = vshrl.u32 %v1569, 7
    %v1571 = vsub.s32 %v1568, %v1570
    %v1572 = vrot.slane %v1558, %v1571
    %v1573 = vcombine.low %v1517, %v1533
    %v1574 = vcombine.high %v1517, %v1533
    %v1576 = vunpack.c.l.s4 1934713408
    %v1577 = vunpack.c.0.s8 %v1576
    %v1578 = vlaneseq
    %v1579 = vshrl.u32 %v1578, 7
    %v1580 = vsub.s32 %v1577, %v1579
    %v1581 = vrot.slane %v1573, %v1580
    %v1583 = vunpack.c.l.s4 1934713408
    %v1584 = vunpack.c.0.s8 %v1583
    %v1585 = vlaneseq
    %v1586 = vshrl.u32 %v1585, 7
    %v1587 = vsub.s32 %v1584, %v1586
    %v1588 = vrot.slane %v1574, %v1587
    %v1589 = vcombine.low %v1524, %v1540
    %v1590 = vcombine.high %v1524, %v1540
    %v1592 = vunpack.c.l.s4 1934713408
    %v1593 = vunpack.c.0.s8 %v1592
    %v1594 = vlaneseq
    %v1595 = vshrl.u32 %v1594, 7
    %v1596 = vsub.s32 %v1593, %v1595
    %v1597 = vrot.slane %v1589, %v1596
    %v1599 = vunpack.c.l.s4 1934713408
    %v1600 = vunpack.c.0.s8 %v1599
    %v1601 = vlaneseq
    %v1602 = vshrl.u32 %v1601, 7
    %v1603 = vsub.s32 %v1600, %v1602
    %v1604 = vrot.slane %v1590, %v1603
    %v1605 = vcombine.low %v1549, %v1581
    %v1606 = vcombine.high %v1549, %v1581
    %v1607 = vcombine.low %v1556, %v1588
    %v1608 = vcombine.high %v1556, %v1588
    %v1609 = vcombine.low %v1565, %v1597
    %v1610 = vcombine.high %v1565, %v1597
    %v1611 = vcombine.low %v1572, %v1604
    %v1612 = vcombine.high %v1572, %v1604
    %v1613 = vcombine.low %v527, %v565
    %v1614 = vcombine.high %v527, %v565
    %v1616 = vunpack.c.l.s4 1983009808
    %v1617 = vunpack.c.0.s8 %v1616
    %v1618 = vlaneseq
    %v1619 = vshrl.u32 %v1618, 7
    %v1620 = vsub.s32 %v1617, %v1619
    %v1621 = vrot.slane %v1613, %v1620
    %v1623 = vunpack.c.l.s4 1983009808
    %v1624 = vunpack.c.0.s8 %v1623
    %v1625 = vlaneseq
    %v1626 = vshrl.u32 %v1625, 7
    %v1627 = vsub.s32 %v1624, %v1626
    %v1628 = vrot.slane %v1614, %v1627
    %v1629 = vcombine.low %v546, %v584
    %v1630 = vcombine.high %v546, %v584
    %v1632 = vunpack.c.l.s4 1983009808
    %v1633 = vunpack.c.0.s8 %v1632
    %v1634 = vlaneseq
    %v1635 = vshrl.u32 %v1634, 7
    %v1636 = vsub.s32 %v1633, %v1635
    %v1637 = vrot.slane %v1629, %v1636
    %v1639 = vunpack.c.l.s4 1983009808
    %v1640 = vunpack.c.0.s8 %v1639
    %v1641 = vlaneseq
    %v1642 = vshrl.u32 %v1641, 7
    %v1643 = vsub.s32 %v1640, %v1642
    %v1644 = vrot.slane %v1630, %v1643
    %v1645 = vcombine.low %v603, %v641
    %v1646 = vcombine.high %v603, %v641
    %v1648 = vunpack.c.l.s4 1983009808
    %v1649 = vunpack.c.0.s8 %v1648
    %v1650 = vlaneseq
    %v1651 = vshrl.u32 %v1650, 7
    %v1652 = vsub.s32 %v1649, %v1651
    %v1653 = vrot.slane %v1645, %v1652
    %v1655 = vunpack.c.l.s4 1983009808
    %v1656 = vunpack.c.0.s8 %v1655
    %v1657 = vlaneseq
    %v1658 = vshrl.u32 %v1657, 7
    %v1659 = vsub.s32 %v1656, %v1658
    %v1660 = vrot.slane %v1646, %v1659
    %v1661 = vcombine.low %v622, %v660
    %v1662 = vcombine.high %v622, %v660
    %v1664 = vunpack.c.l.s4 1983009808
    %v1665 = vunpack.c.0.s8 %v1664
    %v1666 = vlaneseq
    %v1667 = vshrl.u32 %v1666, 7
    %v1668 = vsub.s32 %v1665, %v1667
    %v1669 = vrot.slane %v1661, %v1668
    %v1671 = vunpack.c.l.s4 1983009808
    %v1672 = vunpack.c.0.s8 %v1671
    %v1673 = vlaneseq
    %v1674 = vshrl.u32 %v1673, 7
    %v1675 = vsub.s32 %v1672, %v1674
    %v1676 = vrot.slane %v1662, %v1675
    %v1677 = vcombine.low %v1621, %v1637
    %v1678 = vcombine.high %v1621, %v1637
    %v1680 = vunpack.c.l.s4 1934713408
    %v1681 = vunpack.c.0.s8 %v1680
    %v1682 = vlaneseq
    %v1683 = vshrl.u32 %v1682, 7
    %v1684 = vsub.s32 %v1681, %v1683
    %v1685 = vrot.slane %v1677, %v1684
    %v1687 = vunpack.c.l.s4 1934713408
    %v1688 = vunpack.c.0.s8 %v1687
    %v1689 = vlaneseq
    %v1690 = vshrl.u32 %v1689, 7
    %v1691 = vsub.s32 %v1688, %v1690
    %v1692 = vrot.slane %v1678, %v1691
    %v1693 = vcombine.low %v1628, %v1644
    %v1694 = vcombine.high %v1628, %v1644
    %v1696 = vunpack.c.l.s4 1934713408
    %v1697 = vunpack.c.0.s8 %v1696
    %v1698 = vlaneseq
    %v1699 = vshrl.u32 %v1698, 7
    %v1700 = vsub.s32 %v1697, %v1699
    %v1701 = vrot.slane %v1693, %v1700
    %v1703 = vunpack.c.l.s4 1934713408
    %v1704 = vunpack.c.0.s8 %v1703
    %v1705 = vlaneseq
    %v1706 = vshrl.u32 %v1705, 7
    %v1707 = vsub.s32 %v1704, %v1706
    %v1708 = vrot.slane %v1694, %v1707
    %v1709 = vcombine.low %v1653, %v1669
    %v1710 = vcombine.high %v1653, %v1669
    %v1712 = vunpack.c.l.s4 1934713408
    %v1713 = vunpack.c.0.s8 %v1712
    %v1714 = vlaneseq
    %v1715 = vshrl.u32 %v1714, 7
    %v1716 = vsub.s32 %v1713, %v1715
    %v1717 = vrot.slane %v1709, %v1716
    %v1719 = vunpack.c.l.s4 1934713408
    %v1720 = vunpack.c.0.s8 %v1719
    %v1721 = vlaneseq
    %v1722 = vshrl.u32 %v1721, 7
    %v1723 = vsub.s32 %v1720, %v1722
    %v1724 = vrot.slane %v1710, %v1723
    %v1725 = vcombine.low %v1660, %v1676
    %v1726 = vcombine.high %v1660, %v1676
    %v1728 = vunpack.c.l.s4 1934713408
    %v1729 = vunpack.c.0.s8 %v1728
    %v1730 = vlaneseq
    %v1731 = vshrl.u32 %v1730, 7
    %v1732 = vsub.s32 %v1729, %v1731
    %v1733 = vrot.slane %v1725, %v1732
    %v1735 = vunpack.c.l.s4 1934713408
    %v1736 = vunpack.c.0.s8 %v1735
    %v1737 = vlaneseq
    %v1738 = vshrl.u32 %v1737, 7
    %v1739 = vsub.s32 %v1736, %v1738
    %v1740 = vrot.slane %v1726, %v1739
    %v1741 = vcombine.low %v1685, %v1717
    %v1742 = vcombine.high %v1685, %v1717
    %v1743 = vcombine.low %v1692, %v1724
    %v1744 = vcombine.high %v1692, %v1724
    %v1745 = vcombine.low %v1701, %v1733
    %v1746 = vcombine.high %v1701, %v1733
    %v1747 = vcombine.low %v1708, %v1740
    %v1748 = vcombine.high %v1708, %v1740
    %1751 = vrot.lane.b32.xlu0 %v790, 32
    %v1752 = vpop.permute.xlu0 %1751
    %1753 = vrot.lane.b32.xlu0 %v926, 32
    %v1754 = vpop.permute.xlu0 %1753
    %1759 = vrot.lane.b32.xlu0 %v791, 64
    %v1760 = vpop.permute.xlu0 %1759
    %1761 = vrot.lane.b32.xlu0 %v927, 64
    %v1762 = vpop.permute.xlu0 %1761
    %1767 = vrot.lane.b32.xlu0 %v792, 96
    %v1768 = vpop.permute.xlu0 %1767
    %1769 = vrot.lane.b32.xlu0 %v928, 96
    %v1770 = vpop.permute.xlu0 %1769
    %1775 = vrot.lane.b32.xlu0 %v794, 32
    %v1776 = vpop.permute.xlu0 %1775
    %1777 = vrot.lane.b32.xlu0 %v930, 32
    %v1778 = vpop.permute.xlu0 %1777
    %1783 = vrot.lane.b32.xlu0 %v795, 64
    %v1784 = vpop.permute.xlu0 %1783
    %1785 = vrot.lane.b32.xlu0 %v931, 64
    %v1786 = vpop.permute.xlu0 %1785
    %1791 = vrot.lane.b32.xlu0 %v796, 96
    %v1792 = vpop.permute.xlu0 %1791
    %1793 = vrot.lane.b32.xlu0 %v932, 96
    %v1794 = vpop.permute.xlu0 %1793
    %1799 = vrot.lane.b32.xlu0 %v1062, 32
    %v1800 = vpop.permute.xlu0 %1799
    %1801 = vrot.lane.b32.xlu0 %v1198, 32
    %v1802 = vpop.permute.xlu0 %1801
    %1807 = vrot.lane.b32.xlu0 %v1063, 64
    %v1808 = vpop.permute.xlu0 %1807
    %1809 = vrot.lane.b32.xlu0 %v1199, 64
    %v1810 = vpop.permute.xlu0 %1809
    %1815 = vrot.lane.b32.xlu0 %v1064, 96
    %v1816 = vpop.permute.xlu0 %1815
    %1817 = vrot.lane.b32.xlu0 %v1200, 96
    %v1818 = vpop.permute.xlu0 %1817
    %1823 = vrot.lane.b32.xlu0 %v1066, 32
    %v1824 = vpop.permute.xlu0 %1823
    %1825 = vrot.lane.b32.xlu0 %v1202, 32
    %v1826 = vpop.permute.xlu0 %1825
    %1831 = vrot.lane.b32.xlu0 %v1067, 64
    %v1832 = vpop.permute.xlu0 %1831
    %1833 = vrot.lane.b32.xlu0 %v1203, 64
    %v1834 = vpop.permute.xlu0 %1833
    %1839 = vrot.lane.b32.xlu0 %v1068, 96
    %v1840 = vpop.permute.xlu0 %1839
    %1841 = vrot.lane.b32.xlu0 %v1204, 96
    %v1842 = vpop.permute.xlu0 %1841
    %1847 = vrot.lane.b32.xlu0 %v1334, 32
    %v1848 = vpop.permute.xlu0 %1847
    %1849 = vrot.lane.b32.xlu0 %v1470, 32
    %v1850 = vpop.permute.xlu0 %1849
    %1855 = vrot.lane.b32.xlu0 %v1335, 64
    %v1856 = vpop.permute.xlu0 %1855
    %1857 = vrot.lane.b32.xlu0 %v1471, 64
    %v1858 = vpop.permute.xlu0 %1857
    %1863 = vrot.lane.b32.xlu0 %v1336, 96
    %v1864 = vpop.permute.xlu0 %1863
    %1865 = vrot.lane.b32.xlu0 %v1472, 96
    %v1866 = vpop.permute.xlu0 %1865
    %1871 = vrot.lane.b32.xlu0 %v1338, 32
    %v1872 = vpop.permute.xlu0 %1871
    %1873 = vrot.lane.b32.xlu0 %v1474, 32
    %v1874 = vpop.permute.xlu0 %1873
    %1879 = vrot.lane.b32.xlu0 %v1339, 64
    %v1880 = vpop.permute.xlu0 %1879
    %1881 = vrot.lane.b32.xlu0 %v1475, 64
    %v1882 = vpop.permute.xlu0 %1881
    %1887 = vrot.lane.b32.xlu0 %v1340, 96
    %v1888 = vpop.permute.xlu0 %1887
    %1889 = vrot.lane.b32.xlu0 %v1476, 96
    %v1890 = vpop.permute.xlu0 %1889
    %1895 = vrot.lane.b32.xlu0 %v1606, 32
    %v1896 = vpop.permute.xlu0 %1895
    %1897 = vrot.lane.b32.xlu0 %v1742, 32
    %v1898 = vpop.permute.xlu0 %1897
    %1903 = vrot.lane.b32.xlu0 %v1607, 64
    %v1904 = vpop.permute.xlu0 %1903
    %1905 = vrot.lane.b32.xlu0 %v1743, 64
    %v1906 = vpop.permute.xlu0 %1905
    %1911 = vrot.lane.b32.xlu0 %v1608, 96
    %v1912 = vpop.permute.xlu0 %1911
    %1913 = vrot.lane.b32.xlu0 %v1744, 96
    %v1914 = vpop.permute.xlu0 %1913
    %1919 = vrot.lane.b32.xlu0 %v1610, 32
    %v1920 = vpop.permute.xlu0 %1919
    %1921 = vrot.lane.b32.xlu0 %v1746, 32
    %v1922 = vpop.permute.xlu0 %1921
    %1927 = vrot.lane.b32.xlu0 %v1611, 64
    %v1928 = vpop.permute.xlu0 %1927
    %1929 = vrot.lane.b32.xlu0 %v1747, 64
    %v1930 = vpop.permute.xlu0 %1929
    %1935 = vrot.lane.b32.xlu0 %v1612, 96
    %v1936 = vpop.permute.xlu0 %1935
    %1937 = vrot.lane.b32.xlu0 %v1748, 96
    %v1938 = vpop.permute.xlu0 %1937
    %v1941 = vsel %vm177, %v789, %v1752
    %v1942 = vsel %vm177, %v925, %v1754
    %vm1943 = vcmask 523264
    %v1944 = vsel %vm1943, %v1941, %v1760
    %v1945 = vsel %vm1943, %v1942, %v1762
    %vm1946 = vcmask 785408
    %v1947 = vsel %vm1946, %v1944, %v1768
    %v1948 = vsel %vm1946, %v1945, %v1770
    %v1949 = vsel %vm177, %v793, %v1776
    %v1950 = vsel %vm177, %v929, %v1778
    %v1951 = vsel %vm1943, %v1949, %v1784
    %v1952 = vsel %vm1943, %v1950, %v1786
    %v1953 = vsel %vm1946, %v1951, %v1792
    %v1954 = vsel %vm1946, %v1952, %v1794
    %v1955 = vsel %vm177, %v1061, %v1800
    %v1956 = vsel %vm177, %v1197, %v1802
    %v1957 = vsel %vm1943, %v1955, %v1808
    %v1958 = vsel %vm1943, %v1956, %v1810
    %v1959 = vsel %vm1946, %v1957, %v1816
    %v1960 = vsel %vm1946, %v1958, %v1818
    %v1961 = vsel %vm177, %v1065, %v1824
    %v1962 = vsel %vm177, %v1201, %v1826
    %v1963 = vsel %vm1943, %v1961, %v1832
    %v1964 = vsel %vm1943, %v1962, %v1834
    %v1965 = vsel %vm1946, %v1963, %v1840
    %v1966 = vsel %vm1946, %v1964, %v1842
    %v1967 = vsel %vm177, %v1333, %v1848
    %v1968 = vsel %vm177, %v1469, %v1850
    %v1969 = vsel %vm1943, %v1967, %v1856
    %v1970 = vsel %vm1943, %v1968, %v1858
    %v1971 = vsel %vm1946, %v1969, %v1864
    %v1972 = vsel %vm1946, %v1970, %v1866
    %v1973 = vsel %vm177, %v1337, %v1872
    %v1974 = vsel %vm177, %v1473, %v1874
    %v1975 = vsel %vm1943, %v1973, %v1880
    %v1976 = vsel %vm1943, %v1974, %v1882
    %v1977 = vsel %vm1946, %v1975, %v1888
    %v1978 = vsel %vm1946, %v1976, %v1890
    %v1979 = vsel %vm177, %v1605, %v1896
    %v1980 = vsel %vm177, %v1741, %v1898
    %v1981 = vsel %vm1943, %v1979, %v1904
    %v1982 = vsel %vm1943, %v1980, %v1906
    %v1983 = vsel %vm1946, %v1981, %v1912
    %v1984 = vsel %vm1946, %v1982, %v1914
    %v1985 = vsel %vm177, %v1609, %v1920
    %v1986 = vsel %vm177, %v1745, %v1922
    %v1987 = vsel %vm1943, %v1985, %v1928
    %v1988 = vsel %vm1943, %v1986, %v1930
    %v1989 = vsel %vm1946, %v1987, %v1936
    %v1990 = vsel %vm1946, %v1988, %v1938
    %1993 = vrot.lane.b32.xlu0 %v355, 32
    %v1994 = vpop.permute.xlu0 %1993
    %1995 = vrot.lane.b32.xlu0 %v356, 32
    %v1996 = vpop.permute.xlu0 %1995
    %1999 = vrot.lane.b32.xlu0 %v355, 64
    %v2000 = vpop.permute.xlu0 %1999
    %2001 = vrot.lane.b32.xlu0 %v356, 64
    %v2002 = vpop.permute.xlu0 %2001
    %2005 = vrot.lane.b32.xlu0 %v355, 96
    %v2006 = vpop.permute.xlu0 %2005
    %2007 = vrot.lane.b32.xlu0 %v356, 96
    %v2008 = vpop.permute.xlu0 %2007
    %v2011 = vsel %vm177, %v355, %v1994
    %v2012 = vsel %vm177, %v356, %v1996
    %v2013 = vsel %vm1943, %v2011, %v2000
    %v2014 = vsel %vm1943, %v2012, %v2002
    %v2015 = vsel %vm1946, %v2013, %v2006
    %v2016 = vsel %vm1946, %v2014, %v2008
    %v2017 = vmul.f32 %v1947, %v2015
    %v2018 = vmul.f32 %v1953, %v2015
    %v2019 = vmul.f32 %v1959, %v2015
    %v2020 = vmul.f32 %v1965, %v2015
    %v2021 = vmul.f32 %v1971, %v2015
    %v2022 = vmul.f32 %v1977, %v2015
    %v2023 = vmul.f32 %v1983, %v2015
    %v2024 = vmul.f32 %v1989, %v2015
    %v2025 = vmul.f32 %v1948, %v2016
    %v2026 = vmul.f32 %v1954, %v2016
    %v2027 = vmul.f32 %v1960, %v2016
    %v2028 = vmul.f32 %v1966, %v2016
    %v2029 = vmul.f32 %v1972, %v2016
    %v2030 = vmul.f32 %v1978, %v2016
    %v2031 = vmul.f32 %v1984, %v2016
    %v2032 = vmul.f32 %v1990, %v2016
    %v2033 = vmul.f32 %v216, %v2017
    %v2034 = vmul.f32 %v218, %v2018
    %v2035 = vmul.f32 %v259, %v2019
    %v2036 = vmul.f32 %v261, %v2020
    %v2037 = vmul.f32 %v302, %v2021
    %v2038 = vmul.f32 %v304, %v2022
    %v2039 = vmul.f32 %v345, %v2023
    %v2040 = vmul.f32 %v347, %v2024
    %v2041 = vmul.f32 %v220, %v2025
    %v2042 = vmul.f32 %v222, %v2026
    %v2043 = vmul.f32 %v263, %v2027
    %v2044 = vmul.f32 %v265, %v2028
    %v2045 = vmul.f32 %v306, %v2029
    %v2046 = vmul.f32 %v308, %v2030
    %v2047 = vmul.f32 %v349, %v2031
    %v2048 = vmul.f32 %v351, %v2032
    %v2049 = vadd.f32 %v2033, %v2034
    %v2050 = vadd.f32 %v2049, %v2035
    %v2051 = vadd.f32 %v2050, %v2036
    %v2052 = vadd.f32 %v2051, %v2037
    %v2053 = vadd.f32 %v2052, %v2038
    %v2054 = vadd.f32 %v2053, %v2039
    %v2055 = vadd.f32 %v2054, %v2040
    %2056 = vadd.xlane.f32.xlu0 %v2055
    %v2057 = vpop.xlane.xlu0 %2056
    %v2058 = vadd.f32 %v2041, %v2042
    %v2059 = vadd.f32 %v2058, %v2043
    %v2060 = vadd.f32 %v2059, %v2044
    %v2061 = vadd.f32 %v2060, %v2045
    %v2062 = vadd.f32 %v2061, %v2046
    %v2063 = vadd.f32 %v2062, %v2047
    %v2064 = vadd.f32 %v2063, %v2048
    %2065 = vadd.xlane.f32.xlu0 %v2064
    %v2066 = vpop.xlane.xlu0 %2065
    %v2067 = vsub.f32 1.0, %v2057
    %v2068 = vadd.f32 %v2067, %v2066
    %v2069 = vmax.f32 %v2068, 0.0
    %vm2070 = vcmask 7168
    %v2071 = vsel %vm2070, %v2069, 0.0
    %2072 = vadd.xlane.f32.xlu0 %v2071
    %v2073 = vpop.xlane.xlu0 %2072
    %v2074 = vrot.slane %v2073, 4
    %v2075 = vadd.f32 %v2073, %v2074
    %v2076 = vrot.slane %v2075, 2
    %v2077 = vadd.f32 %v2075, %v2076
    %v2078 = vrot.slane %v2077, 1
    %v2079 = vadd.f32 %v2077, %v2078
    %s2080 = vtos %v2079
    %v2081 = vstv %s2080
    %2082 = vst [vmem:[#allocation10] sm:$0xff] %v2081
    // Predicated region
    $region34: #{tpu_custom_call.1} parent=1 // pred_check
      _
    $region35: #{tpu_custom_call.1} parent=1 // pred_check_branch
      %2084 = sbr.rel (0) target = $region37
    $region36: #{tpu_custom_call.1} parent=1 // pred_region
      %s2086 = ssub.s32 128, 128
      %2087 = vsyncadd [#allocation4], %s2086
      %s2089 = sshll.u32 [#allocation10], 4
      %s2090 = int_to_ptr.vmem [resolvable:$true] %s2089
      %2092 = dma.vmem_to_hbm [thread:$0]  %s2090, 128, %s4, [#allocation4]
    $region37: #{tpu_custom_call.1} parent=1 // pred_fallthru
      _
    // Predicated region
    $region38: #{tpu_custom_call.1} parent=1 // pred_check
      _
    $region39: #{tpu_custom_call.1} parent=1 // pred_check_branch
      %2094 = sbr.rel (0) target = $region41
    $region40: #{tpu_custom_call.1} parent=1 // pred_region
      %2095 = dma.done [#allocation4], 128
    $region41: #{tpu_custom_call.1} parent=1 // pred_fallthru
      _
    %2096 = vsyncpa [#allocation3], 1
    %2097 = vsyncpa [#allocation6], 1
    %2098 = vsyncpa [#allocation9], 1
    %2099 = vsyncpa [#allocation4], 1

</llo_original>
